<compile_context>
chip_gen: v7x
topology: tpu7x:2x2x1
jax: 0.10.0
libtpu: 0.0.40
codegen_flags: <defaults>
</compile_context>

<pallas_src>
import jax
import jax.numpy as jnp
from jax import lax
from jax.experimental import pallas as pl
from jax.experimental.pallas import tpu as pltpu

# Small, module-consistent sizes
BATCH = 2
SEQ_Q = 8            # query sequence length
SEQ_M = 16           # memory (key/value) sequence length
EMB = 32
NHEAD = 4
HEAD_DIM = EMB // NHEAD
HID = EMB // 2       # PositionwiseFeedForward hidden size
EPS = 1e-5           # nn.LayerNorm default

BQ = BATCH * SEQ_Q   # flattened query rows
BM = BATCH * SEQ_M   # flattened key/value rows


def cross_attn_layer_kernel(tok_ref, bias_ref, winT_ref, woT_ref, w1T_ref, w2T_ref,
                            vecs_ref, o_ref):
    # Whole problem in one kernel invocation (everything already resident in VMEM).
    tok = tok_ref[...]       # (BQ + BM, E): rows [0,BQ) = queries, [BQ, BQ+BM) = mem
    bias = bias_ref[...]     # (BQ, BM)  additive mask: cross-batch blocks + key padding
    vecs = vecs_ref[...]     # (10, E)   packed small parameter vectors

    bq, bk, bv, bo = vecs[0:1], vecs[1:2], vecs[2:3], vecs[3:4]
    g1, be1 = vecs[4:5], vecs[5:6]
    b1 = vecs[6:7, :HID]
    b2, g2, be2 = vecs[7:8], vecs[8:9], vecs[9:10]

    x = tok[:BQ]             # original queries (residual input), (BQ, E)

    # ---- fused in-projection: ONE MXU matmul for Q, K and V ----------------------
    # winT = [Wq^T | Wk^T | Wv^T] of shape (E, 3E); extra cross terms are free
    # (the MXU tile is massively underfilled at these sizes anyway).
    proj = jnp.dot(tok, winT_ref[...], preferred_element_type=jnp.float32)  # (BQ+BM, 3E)
    q = proj[:BQ, 0 * EMB:1 * EMB] + bq      # (BQ, E)
    k = proj[BQ:, 1 * EMB:2 * EMB] + bk      # (BM, E)
    v = proj[BQ:, 2 * EMB:3 * EMB] + bv      # (BM, E)

    scale = 1.0 / (HEAD_DIM ** 0.5)
    woT = woT_ref[...]                        # (E, E), pre-transposed

    # ---- multi-head attention, batched over the batch dim -----------------------
    # Head context is accumulated directly into the out-projection (no concat);
    # the accumulator starts from the residual + out-projection bias.
    acc = x + bo                              # (BQ, E)
    for h in range(NHEAD):                    # static, unrolled (NHEAD = 4)
        sl = slice(h * HEAD_DIM, (h + 1) * HEAD_DIM)
        qh, kh, vh = q[:, sl], k[:, sl], v[:, sl]
        # q @ k^T without materializing a transpose: contract last dims of both.
        s = lax.dot_general(qh, kh, (((1,), (1,)), ((), ())),
                            preferred_element_type=jnp.float32) * scale + bias
        m = jnp.max(s, axis=-1, keepdims=True)
        p = jnp.exp(s - m)
        denom = jnp.sum(p, axis=-1, keepdims=True)
        attn = p * pl.reciprocal(denom, approx=True)        # EUP slot, ~free
        ctx_h = jnp.dot(attn, vh, preferred_element_type=jnp.float32)       # (BQ, hd)
        acc = acc + jnp.dot(ctx_h, woT[sl, :], preferred_element_type=jnp.float32)

    # ---- residual + LayerNorm 1 --------------------------------------------------
    r1 = acc
    mu1 = jnp.mean(r1, axis=-1, keepdims=True)
    var1 = jnp.mean((r1 - mu1) ** 2, axis=-1, keepdims=True)
    x1 = (r1 - mu1) * lax.rsqrt(var1 + EPS) * g1 + be1

    # ---- position-wise FFN (dropout = identity in eval mode) --------------------
    hmid = jnp.maximum(
        jnp.dot(x1, w1T_ref[...], preferred_element_type=jnp.float32) + b1, 0.0)
    ffn = jnp.dot(hmid, w2T_ref[...], preferred_element_type=jnp.float32) + b2

    # ---- residual + LayerNorm 2 --------------------------------------------------
    r2 = x1 + ffn
    mu2 = jnp.mean(r2, axis=-1, keepdims=True)
    var2 = jnp.mean((r2 - mu2) ** 2, axis=-1, keepdims=True)
    o_ref[...] = (r2 - mu2) * lax.rsqrt(var2 + EPS) * g2 + be2


def cross_attention_layer(quries, mem, masks, params):
    """quries: (B, SQ, E) f32; mem: (B, SM, E) f32; masks: (B, SM) bool (True = ignore)."""
    B, SQ, E = quries.shape
    SM = mem.shape[1]
    bq_rows, bm_rows = B * SQ, B * SM

    # Flatten batch into rows and stack queries + mem for one fused in-projection.
    tokens = jnp.concatenate(
        [quries.reshape(bq_rows, E), mem.reshape(bm_rows, E)], axis=0)

    # Additive attention bias: -inf across batch boundaries and on padded keys.
    qb = jnp.repeat(jnp.arange(B), SQ)            # batch id of each query row
    kb = jnp.repeat(jnp.arange(B), SM)            # batch id of each key row
    cross = qb[:, None] != kb[None, :]
    pad = masks.reshape(bm_rows)[None, :]
    bias = jnp.where(cross | pad, -1e30, 0.0).astype(jnp.float32)   # (BQ, BM)

    # Pre-transposed / fused weights (done once, outside the kernel).
    winT = jnp.concatenate(
        [params["wq"].T, params["wk"].T, params["wv"].T], axis=1)   # (E, 3E)
    woT = params["wo"].T                                            # (E, E)
    w1T = params["w1"].T                                            # (E, HID)
    w2T = params["w2"].T                                            # (HID, E)

    # All small vectors packed into a single (10, E) array.
    vecs = jnp.stack([
        params["bq"], params["bk"], params["bv"], params["bo"],
        params["ln1_g"], params["ln1_b"],
        jnp.pad(params["b1"], (0, E - HID)),
        params["b2"], params["ln2_g"], params["ln2_b"],
    ], axis=0).astype(jnp.float32)

    def full(shape):
        return pl.BlockSpec(shape, lambda i: (0,) * len(shape))

    out = pl.pallas_call(
        cross_attn_layer_kernel,
        out_shape=jax.ShapeDtypeStruct((bq_rows, E), jnp.float32),
        grid_spec=pltpu.PrefetchScalarGridSpec(
            num_scalar_prefetch=0,
            grid=(1,),                      # single step: total working set is a few KB
            in_specs=[
                full(tokens.shape), full(bias.shape),
                full(winT.shape), full(woT.shape),
                full(w1T.shape), full(w2T.shape),
                full(vecs.shape),
            ],
            out_specs=full((bq_rows, E)),
        ),
        compiler_params=pltpu.CompilerParams(dimension_semantics=("arbitrary",)),
    )(tokens, bias, winT, woT, w1T, w2T, vecs)
    return out.reshape(B, SQ, E)


# ------------------------------ pure-JAX reference --------------------------------
def _layer_norm(x, g, b):
    mu = x.mean(-1, keepdims=True)
    var = ((x - mu) ** 2).mean(-1, keepdims=True)
    return (x - mu) / jnp.sqrt(var + EPS) * g + b


def ref_forward(quries, mem, masks, p):
    B, SQ, E = quries.shape
    SM = mem.shape[1]
    q = quries @ p["wq"].T + p["bq"]
    k = mem @ p["wk"].T + p["bk"]
    v = mem @ p["wv"].T + p["bv"]
    qh = q.reshape(B, SQ, NHEAD, HEAD_DIM).transpose(0, 2, 1, 3)
    kh = k.reshape(B, SM, NHEAD, HEAD_DIM).transpose(0, 2, 1, 3)
    vh = v.reshape(B, SM, NHEAD, HEAD_DIM).transpose(0, 2, 1, 3)
    scores = jnp.einsum("bhqd,bhkd->bhqk", qh, kh) / jnp.sqrt(HEAD_DIM)
    scores = scores + jnp.where(masks, -1e30, 0.0)[:, None, None, :]
    attn = jax.nn.softmax(scores, axis=-1)
    ctx = jnp.einsum("bhqk,bhkd->bhqd", attn, vh).transpose(0, 2, 1, 3).reshape(B, SQ, E)
    x = ctx @ p["wo"].T + p["bo"]
    x1 = _layer_norm(quries + x, p["ln1_g"], p["ln1_b"])
    h = jnp.maximum(x1 @ p["w1"].T + p["b1"], 0.0)
    ffn = h @ p["w2"].T + p["b2"]
    return _layer_norm(x1 + ffn, p["ln2_g"], p["ln2_b"])


def init_params(key):
    ks = jax.random.split(key, 8)
    s_in = 1.0 / (EMB ** 0.5)
    # nn.MultiheadAttention in_proj_weight is (3E, E): rows = [Wq; Wk; Wv]
    in_w = jax.random.uniform(ks[0], (3 * EMB, EMB), jnp.float32, -s_in, s_in)
    in_b = jax.random.uniform(ks[1], (3 * EMB,), jnp.float32, -s_in, s_in)
    wo = jax.random.uniform(ks[2], (EMB, EMB), jnp.float32, -s_in, s_in)
    bo = jax.random.uniform(ks[3], (EMB,), jnp.float32, -s_in, s_in)
    w1 = jax.random.uniform(ks[4], (HID, EMB), jnp.float32, -s_in, s_in)
    b1 = jax.random.uniform(ks[5], (HID,), jnp.float32, -s_in, s_in)
    s_h = 1.0 / (HID ** 0.5)
    w2 = jax.random.uniform(ks[6], (EMB, HID), jnp.float32, -s_h, s_h)
    b2 = jax.random.uniform(ks[7], (EMB,), jnp.float32, -s_h, s_h)
    return {
        "wq": in_w[0 * EMB:1 * EMB], "wk": in_w[1 * EMB:2 * EMB], "wv": in_w[2 * EMB:3 * EMB],
        "bq": in_b[0 * EMB:1 * EMB], "bk": in_b[1 * EMB:2 * EMB], "bv": in_b[2 * EMB:3 * EMB],
        "wo": wo, "bo": bo,
        "ln1_g": jnp.ones((EMB,), jnp.float32), "ln1_b": jnp.zeros((EMB,), jnp.float32),
        "w1": w1, "b1": b1, "w2": w2, "b2": b2,
        "ln2_g": jnp.ones((EMB,), jnp.float32), "ln2_b": jnp.zeros((EMB,), jnp.float32),
    }


if __name__ == "__main__":
    key = jax.random.PRNGKey(0)
    kq, km, kp = jax.random.split(key, 3)
    quries = jax.random.normal(kq, (BATCH, SEQ_Q, EMB), jnp.float32)
    mem = jax.random.normal(km, (BATCH, SEQ_M, EMB), jnp.float32)

    # key_padding_mask: True means "ignore this memory key" (PyTorch convention).
    masks = jnp.zeros((BATCH, SEQ_M), dtype=bool)
    masks = masks.at[0, SEQ_M - 3:].set(True)
    masks = masks.at[1, SEQ_M - 5:].set(True)

    params = init_params(kp)

    out = cross_attention_layer(quries, mem, masks, params)
    out = jax.block_until_ready(out)

    ref = ref_forward(quries, mem, masks, params)
    assert out.shape == (BATCH, SEQ_Q, EMB)
    # Tolerance allows for the EUP approximate-reciprocal softmax normalization.
    assert jnp.allclose(out, ref, atol=2e-3, rtol=2e-3), (
        f"mismatch vs reference: max abs err {jnp.abs(out - ref).max()}")

    print("KERNEL_OK")
</pallas_src>

<mosaic_0001>
module attributes {stable_mosaic.version = 11 : i64} {
  func.func @cross_attn_layer_kernel(%arg0: i32, %arg1: memref<48x32xf32, #tpu.memory_space<vmem>>, %arg2: memref<16x32xf32, #tpu.memory_space<vmem>>, %arg3: memref<32x96xf32, #tpu.memory_space<vmem>>, %arg4: memref<32x32xf32, #tpu.memory_space<vmem>>, %arg5: memref<32x16xf32, #tpu.memory_space<vmem>>, %arg6: memref<16x32xf32, #tpu.memory_space<vmem>>, %arg7: memref<10x32xf32, #tpu.memory_space<vmem>>, %arg8: memref<16x32xf32, #tpu.memory_space<vmem>>) attributes {dimension_semantics = [#tpu.dimension_semantics<arbitrary>], iteration_bounds = array<i64: 1>, scalar_prefetch = 0 : i64, scratch_operands = 0 : i64, tpu.core_type = #tpu.core_type<tc>, window_params = [{pipeline_mode = #tpu.pipeline_mode<synchronous>, transform_indices = @transform_0, window_bounds = array<i64: 48, 32>}, {pipeline_mode = #tpu.pipeline_mode<synchronous>, transform_indices = @transform_1, window_bounds = array<i64: 16, 32>}, {pipeline_mode = #tpu.pipeline_mode<synchronous>, transform_indices = @transform_2, window_bounds = array<i64: 32, 96>}, {pipeline_mode = #tpu.pipeline_mode<synchronous>, transform_indices = @transform_3, window_bounds = array<i64: 32, 32>}, {pipeline_mode = #tpu.pipeline_mode<synchronous>, transform_indices = @transform_4, window_bounds = array<i64: 32, 16>}, {pipeline_mode = #tpu.pipeline_mode<synchronous>, transform_indices = @transform_5, window_bounds = array<i64: 16, 32>}, {pipeline_mode = #tpu.pipeline_mode<synchronous>, transform_indices = @transform_6, window_bounds = array<i64: 10, 32>}, {pipeline_mode = #tpu.pipeline_mode<synchronous>, transform_indices = @transform_7, window_bounds = array<i64: 16, 32>}]} {
    %c0 = arith.constant 0 : index
    %c0_0 = arith.constant 0 : index
    %0 = vector.load %arg1[%c0, %c0_0] : memref<48x32xf32, #tpu.memory_space<vmem>>, vector<48x32xf32>
    %c0_1 = arith.constant 0 : index
    %c0_2 = arith.constant 0 : index
    %1 = vector.load %arg2[%c0_1, %c0_2] : memref<16x32xf32, #tpu.memory_space<vmem>>, vector<16x32xf32>
    %c0_3 = arith.constant 0 : index
    %c0_4 = arith.constant 0 : index
    %2 = vector.load %arg7[%c0_3, %c0_4] : memref<10x32xf32, #tpu.memory_space<vmem>>, vector<10x32xf32>
    %3 = vector.extract_strided_slice %2 {offsets = [0, 0], sizes = [1, 32], strides = [1, 1]} : vector<10x32xf32> to vector<1x32xf32>
    %4 = vector.extract_strided_slice %2 {offsets = [1, 0], sizes = [1, 32], strides = [1, 1]} : vector<10x32xf32> to vector<1x32xf32>
    %5 = vector.extract_strided_slice %2 {offsets = [2, 0], sizes = [1, 32], strides = [1, 1]} : vector<10x32xf32> to vector<1x32xf32>
    %6 = vector.extract_strided_slice %2 {offsets = [3, 0], sizes = [1, 32], strides = [1, 1]} : vector<10x32xf32> to vector<1x32xf32>
    %7 = vector.extract_strided_slice %2 {offsets = [4, 0], sizes = [1, 32], strides = [1, 1]} : vector<10x32xf32> to vector<1x32xf32>
    %8 = vector.extract_strided_slice %2 {offsets = [5, 0], sizes = [1, 32], strides = [1, 1]} : vector<10x32xf32> to vector<1x32xf32>
    %9 = vector.extract_strided_slice %2 {offsets = [6, 0], sizes = [1, 16], strides = [1, 1]} : vector<10x32xf32> to vector<1x16xf32>
    %10 = vector.extract_strided_slice %2 {offsets = [7, 0], sizes = [1, 32], strides = [1, 1]} : vector<10x32xf32> to vector<1x32xf32>
    %11 = vector.extract_strided_slice %2 {offsets = [8, 0], sizes = [1, 32], strides = [1, 1]} : vector<10x32xf32> to vector<1x32xf32>
    %12 = vector.extract_strided_slice %2 {offsets = [9, 0], sizes = [1, 32], strides = [1, 1]} : vector<10x32xf32> to vector<1x32xf32>
    %13 = vector.extract_strided_slice %0 {offsets = [0, 0], sizes = [16, 32], strides = [1, 1]} : vector<48x32xf32> to vector<16x32xf32>
    %c0_5 = arith.constant 0 : index
    %c0_6 = arith.constant 0 : index
    %14 = vector.load %arg3[%c0_5, %c0_6] : memref<32x96xf32, #tpu.memory_space<vmem>>, vector<32x96xf32>
    %cst = arith.constant dense<0.000000e+00> : vector<48x96xf32>
    %15 = tpu.matmul %0, %14, %cst {dimension_numbers = #tpu.dot_dimension_numbers<[1], [0], [0], [1], [0, 0, 1, 1], [], []>} : vector<48x32xf32>, vector<32x96xf32>, vector<48x96xf32> -> vector<48x96xf32>
    %16 = vector.extract_strided_slice %15 {offsets = [0, 0], sizes = [16, 32], strides = [1, 1]} : vector<48x96xf32> to vector<16x32xf32>
    %17 = vector.broadcast %3 : vector<1x32xf32> to vector<16x32xf32>
    %18 = arith.addf %16, %17 : vector<16x32xf32>
    %19 = vector.extract_strided_slice %15 {offsets = [16, 32], sizes = [32, 32], strides = [1, 1]} : vector<48x96xf32> to vector<32x32xf32>
    %20 = vector.broadcast %4 : vector<1x32xf32> to vector<32x32xf32>
    %21 = arith.addf %19, %20 : vector<32x32xf32>
    %22 = vector.extract_strided_slice %15 {offsets = [16, 64], sizes = [32, 32], strides = [1, 1]} : vector<48x96xf32> to vector<32x32xf32>
    %23 = vector.broadcast %5 : vector<1x32xf32> to vector<32x32xf32>
    %24 = arith.addf %22, %23 : vector<32x32xf32>
    %c0_7 = arith.constant 0 : index
    %c0_8 = arith.constant 0 : index
    %25 = vector.load %arg4[%c0_7, %c0_8] : memref<32x32xf32, #tpu.memory_space<vmem>>, vector<32x32xf32>
    %26 = vector.broadcast %6 : vector<1x32xf32> to vector<16x32xf32>
    %27 = arith.addf %13, %26 : vector<16x32xf32>
    %28 = vector.extract_strided_slice %18 {offsets = [0, 0], sizes = [16, 8], strides = [1, 1]} : vector<16x32xf32> to vector<16x8xf32>
    %29 = vector.extract_strided_slice %21 {offsets = [0, 0], sizes = [32, 8], strides = [1, 1]} : vector<32x32xf32> to vector<32x8xf32>
    %30 = vector.extract_strided_slice %24 {offsets = [0, 0], sizes = [32, 8], strides = [1, 1]} : vector<32x32xf32> to vector<32x8xf32>
    %cst_9 = arith.constant dense<0.000000e+00> : vector<16x32xf32>
    %31 = tpu.matmul %28, %29, %cst_9 {dimension_numbers = #tpu.dot_dimension_numbers<[1], [1], [0], [0], [0, 0, 1, 0], [], []>} : vector<16x8xf32>, vector<32x8xf32>, vector<16x32xf32> -> vector<16x32xf32>
    %cst_10 = arith.constant 0.353553385 : f32
    %32 = vector.broadcast %cst_10 : f32 to vector<16x32xf32>
    %33 = arith.mulf %31, %32 : vector<16x32xf32>
    %34 = arith.addf %33, %1 : vector<16x32xf32>
    %cst_11 = arith.constant dense<0xFF800000> : vector<16xf32>
    %35 = vector.multi_reduction <maximumf>, %34, %cst_11 [1] : vector<16x32xf32> to vector<16xf32>
    %36 = vector.shape_cast %35 : vector<16xf32> to vector<16x1xf32>
    %37 = vector.broadcast %36 : vector<16x1xf32> to vector<16x32xf32>
    %38 = arith.subf %34, %37 : vector<16x32xf32>
    %39 = math.exp %38 : vector<16x32xf32>
    %cst_12 = arith.constant dense<0.000000e+00> : vector<16xf32>
    %40 = vector.multi_reduction <add>, %39, %cst_12 [1] : vector<16x32xf32> to vector<16xf32>
    %41 = vector.shape_cast %40 : vector<16xf32> to vector<16x1xf32>
    %42 = tpu.reciprocal %41 {approx = true} : vector<16x1xf32> -> vector<16x1xf32>
    %43 = vector.broadcast %42 : vector<16x1xf32> to vector<16x32xf32>
    %44 = arith.mulf %39, %43 : vector<16x32xf32>
    %cst_13 = arith.constant dense<0.000000e+00> : vector<16x8xf32>
    %45 = tpu.matmul %44, %30, %cst_13 {dimension_numbers = #tpu.dot_dimension_numbers<[1], [0], [0], [1], [0, 0, 1, 1], [], []>} : vector<16x32xf32>, vector<32x8xf32>, vector<16x8xf32> -> vector<16x8xf32>
    %46 = vector.extract_strided_slice %25 {offsets = [0, 0], sizes = [8, 32], strides = [1, 1]} : vector<32x32xf32> to vector<8x32xf32>
    %cst_14 = arith.constant dense<0.000000e+00> : vector<16x32xf32>
    %47 = tpu.matmul %45, %46, %cst_14 {dimension_numbers = #tpu.dot_dimension_numbers<[1], [0], [0], [1], [0, 0, 1, 1], [], []>} : vector<16x8xf32>, vector<8x32xf32>, vector<16x32xf32> -> vector<16x32xf32>
    %48 = arith.addf %27, %47 : vector<16x32xf32>
    %49 = vector.extract_strided_slice %18 {offsets = [0, 8], sizes = [16, 8], strides = [1, 1]} : vector<16x32xf32> to vector<16x8xf32>
    %50 = vector.extract_strided_slice %21 {offsets = [0, 8], sizes = [32, 8], strides = [1, 1]} : vector<32x32xf32> to vector<32x8xf32>
    %51 = vector.extract_strided_slice %24 {offsets = [0, 8], sizes = [32, 8], strides = [1, 1]} : vector<32x32xf32> to vector<32x8xf32>
    %cst_15 = arith.constant dense<0.000000e+00> : vector<16x32xf32>
    %52 = tpu.matmul %49, %50, %cst_15 {dimension_numbers = #tpu.dot_dimension_numbers<[1], [1], [0], [0], [0, 0, 1, 0], [], []>} : vector<16x8xf32>, vector<32x8xf32>, vector<16x32xf32> -> vector<16x32xf32>
    %cst_16 = arith.constant 0.353553385 : f32
    %53 = vector.broadcast %cst_16 : f32 to vector<16x32xf32>
    %54 = arith.mulf %52, %53 : vector<16x32xf32>
    %55 = arith.addf %54, %1 : vector<16x32xf32>
    %cst_17 = arith.constant dense<0xFF800000> : vector<16xf32>
    %56 = vector.multi_reduction <maximumf>, %55, %cst_17 [1] : vector<16x32xf32> to vector<16xf32>
    %57 = vector.shape_cast %56 : vector<16xf32> to vector<16x1xf32>
    %58 = vector.broadcast %57 : vector<16x1xf32> to vector<16x32xf32>
    %59 = arith.subf %55, %58 : vector<16x32xf32>
    %60 = math.exp %59 : vector<16x32xf32>
    %cst_18 = arith.constant dense<0.000000e+00> : vector<16xf32>
    %61 = vector.multi_reduction <add>, %60, %cst_18 [1] : vector<16x32xf32> to vector<16xf32>
    %62 = vector.shape_cast %61 : vector<16xf32> to vector<16x1xf32>
    %63 = tpu.reciprocal %62 {approx = true} : vector<16x1xf32> -> vector<16x1xf32>
    %64 = vector.broadcast %63 : vector<16x1xf32> to vector<16x32xf32>
    %65 = arith.mulf %60, %64 : vector<16x32xf32>
    %cst_19 = arith.constant dense<0.000000e+00> : vector<16x8xf32>
    %66 = tpu.matmul %65, %51, %cst_19 {dimension_numbers = #tpu.dot_dimension_numbers<[1], [0], [0], [1], [0, 0, 1, 1], [], []>} : vector<16x32xf32>, vector<32x8xf32>, vector<16x8xf32> -> vector<16x8xf32>
    %67 = vector.extract_strided_slice %25 {offsets = [8, 0], sizes = [8, 32], strides = [1, 1]} : vector<32x32xf32> to vector<8x32xf32>
    %cst_20 = arith.constant dense<0.000000e+00> : vector<16x32xf32>
    %68 = tpu.matmul %66, %67, %cst_20 {dimension_numbers = #tpu.dot_dimension_numbers<[1], [0], [0], [1], [0, 0, 1, 1], [], []>} : vector<16x8xf32>, vector<8x32xf32>, vector<16x32xf32> -> vector<16x32xf32>
    %69 = arith.addf %48, %68 : vector<16x32xf32>
    %70 = vector.extract_strided_slice %18 {offsets = [0, 16], sizes = [16, 8], strides = [1, 1]} : vector<16x32xf32> to vector<16x8xf32>
    %71 = vector.extract_strided_slice %21 {offsets = [0, 16], sizes = [32, 8], strides = [1, 1]} : vector<32x32xf32> to vector<32x8xf32>
    %72 = vector.extract_strided_slice %24 {offsets = [0, 16], sizes = [32, 8], strides = [1, 1]} : vector<32x32xf32> to vector<32x8xf32>
    %cst_21 = arith.constant dense<0.000000e+00> : vector<16x32xf32>
    %73 = tpu.matmul %70, %71, %cst_21 {dimension_numbers = #tpu.dot_dimension_numbers<[1], [1], [0], [0], [0, 0, 1, 0], [], []>} : vector<16x8xf32>, vector<32x8xf32>, vector<16x32xf32> -> vector<16x32xf32>
    %cst_22 = arith.constant 0.353553385 : f32
    %74 = vector.broadcast %cst_22 : f32 to vector<16x32xf32>
    %75 = arith.mulf %73, %74 : vector<16x32xf32>
    %76 = arith.addf %75, %1 : vector<16x32xf32>
    %cst_23 = arith.constant dense<0xFF800000> : vector<16xf32>
    %77 = vector.multi_reduction <maximumf>, %76, %cst_23 [1] : vector<16x32xf32> to vector<16xf32>
    %78 = vector.shape_cast %77 : vector<16xf32> to vector<16x1xf32>
    %79 = vector.broadcast %78 : vector<16x1xf32> to vector<16x32xf32>
    %80 = arith.subf %76, %79 : vector<16x32xf32>
    %81 = math.exp %80 : vector<16x32xf32>
    %cst_24 = arith.constant dense<0.000000e+00> : vector<16xf32>
    %82 = vector.multi_reduction <add>, %81, %cst_24 [1] : vector<16x32xf32> to vector<16xf32>
    %83 = vector.shape_cast %82 : vector<16xf32> to vector<16x1xf32>
    %84 = tpu.reciprocal %83 {approx = true} : vector<16x1xf32> -> vector<16x1xf32>
    %85 = vector.broadcast %84 : vector<16x1xf32> to vector<16x32xf32>
    %86 = arith.mulf %81, %85 : vector<16x32xf32>
    %cst_25 = arith.constant dense<0.000000e+00> : vector<16x8xf32>
    %87 = tpu.matmul %86, %72, %cst_25 {dimension_numbers = #tpu.dot_dimension_numbers<[1], [0], [0], [1], [0, 0, 1, 1], [], []>} : vector<16x32xf32>, vector<32x8xf32>, vector<16x8xf32> -> vector<16x8xf32>
    %88 = vector.extract_strided_slice %25 {offsets = [16, 0], sizes = [8, 32], strides = [1, 1]} : vector<32x32xf32> to vector<8x32xf32>
    %cst_26 = arith.constant dense<0.000000e+00> : vector<16x32xf32>
    %89 = tpu.matmul %87, %88, %cst_26 {dimension_numbers = #tpu.dot_dimension_numbers<[1], [0], [0], [1], [0, 0, 1, 1], [], []>} : vector<16x8xf32>, vector<8x32xf32>, vector<16x32xf32> -> vector<16x32xf32>
    %90 = arith.addf %69, %89 : vector<16x32xf32>
    %91 = vector.extract_strided_slice %18 {offsets = [0, 24], sizes = [16, 8], strides = [1, 1]} : vector<16x32xf32> to vector<16x8xf32>
    %92 = vector.extract_strided_slice %21 {offsets = [0, 24], sizes = [32, 8], strides = [1, 1]} : vector<32x32xf32> to vector<32x8xf32>
    %93 = vector.extract_strided_slice %24 {offsets = [0, 24], sizes = [32, 8], strides = [1, 1]} : vector<32x32xf32> to vector<32x8xf32>
    %cst_27 = arith.constant dense<0.000000e+00> : vector<16x32xf32>
    %94 = tpu.matmul %91, %92, %cst_27 {dimension_numbers = #tpu.dot_dimension_numbers<[1], [1], [0], [0], [0, 0, 1, 0], [], []>} : vector<16x8xf32>, vector<32x8xf32>, vector<16x32xf32> -> vector<16x32xf32>
    %cst_28 = arith.constant 0.353553385 : f32
    %95 = vector.broadcast %cst_28 : f32 to vector<16x32xf32>
    %96 = arith.mulf %94, %95 : vector<16x32xf32>
    %97 = arith.addf %96, %1 : vector<16x32xf32>
    %cst_29 = arith.constant dense<0xFF800000> : vector<16xf32>
    %98 = vector.multi_reduction <maximumf>, %97, %cst_29 [1] : vector<16x32xf32> to vector<16xf32>
    %99 = vector.shape_cast %98 : vector<16xf32> to vector<16x1xf32>
    %100 = vector.broadcast %99 : vector<16x1xf32> to vector<16x32xf32>
    %101 = arith.subf %97, %100 : vector<16x32xf32>
    %102 = math.exp %101 : vector<16x32xf32>
    %cst_30 = arith.constant dense<0.000000e+00> : vector<16xf32>
    %103 = vector.multi_reduction <add>, %102, %cst_30 [1] : vector<16x32xf32> to vector<16xf32>
    %104 = vector.shape_cast %103 : vector<16xf32> to vector<16x1xf32>
    %105 = tpu.reciprocal %104 {approx = true} : vector<16x1xf32> -> vector<16x1xf32>
    %106 = vector.broadcast %105 : vector<16x1xf32> to vector<16x32xf32>
    %107 = arith.mulf %102, %106 : vector<16x32xf32>
    %cst_31 = arith.constant dense<0.000000e+00> : vector<16x8xf32>
    %108 = tpu.matmul %107, %93, %cst_31 {dimension_numbers = #tpu.dot_dimension_numbers<[1], [0], [0], [1], [0, 0, 1, 1], [], []>} : vector<16x32xf32>, vector<32x8xf32>, vector<16x8xf32> -> vector<16x8xf32>
    %109 = vector.extract_strided_slice %25 {offsets = [24, 0], sizes = [8, 32], strides = [1, 1]} : vector<32x32xf32> to vector<8x32xf32>
    %cst_32 = arith.constant dense<0.000000e+00> : vector<16x32xf32>
    %110 = tpu.matmul %108, %109, %cst_32 {dimension_numbers = #tpu.dot_dimension_numbers<[1], [0], [0], [1], [0, 0, 1, 1], [], []>} : vector<16x8xf32>, vector<8x32xf32>, vector<16x32xf32> -> vector<16x32xf32>
    %111 = arith.addf %90, %110 : vector<16x32xf32>
    %cst_33 = arith.constant dense<0.000000e+00> : vector<16xf32>
    %112 = vector.multi_reduction <add>, %111, %cst_33 [1] : vector<16x32xf32> to vector<16xf32>
    %113 = vector.shape_cast %112 : vector<16xf32> to vector<16x1xf32>
    %cst_34 = arith.constant 3.200000e+01 : f32
    %114 = vector.broadcast %cst_34 : f32 to vector<16x1xf32>
    %115 = arith.divf %113, %114 : vector<16x1xf32>
    %116 = vector.broadcast %115 : vector<16x1xf32> to vector<16x32xf32>
    %117 = arith.subf %111, %116 : vector<16x32xf32>
    %118 = arith.mulf %117, %117 : vector<16x32xf32>
    %cst_35 = arith.constant dense<0.000000e+00> : vector<16xf32>
    %119 = vector.multi_reduction <add>, %118, %cst_35 [1] : vector<16x32xf32> to vector<16xf32>
    %120 = vector.shape_cast %119 : vector<16xf32> to vector<16x1xf32>
    %cst_36 = arith.constant 3.200000e+01 : f32
    %121 = vector.broadcast %cst_36 : f32 to vector<16x1xf32>
    %122 = arith.divf %120, %121 : vector<16x1xf32>
    %123 = vector.broadcast %115 : vector<16x1xf32> to vector<16x32xf32>
    %124 = arith.subf %111, %123 : vector<16x32xf32>
    %cst_37 = arith.constant 9.99999974E-6 : f32
    %125 = vector.broadcast %cst_37 : f32 to vector<16x1xf32>
    %126 = arith.addf %122, %125 : vector<16x1xf32>
    %127 = math.rsqrt %126 : vector<16x1xf32>
    %128 = vector.broadcast %127 : vector<16x1xf32> to vector<16x32xf32>
    %129 = arith.mulf %124, %128 : vector<16x32xf32>
    %130 = vector.broadcast %7 : vector<1x32xf32> to vector<16x32xf32>
    %131 = arith.mulf %129, %130 : vector<16x32xf32>
    %132 = vector.broadcast %8 : vector<1x32xf32> to vector<16x32xf32>
    %133 = arith.addf %131, %132 : vector<16x32xf32>
    %c0_38 = arith.constant 0 : index
    %c0_39 = arith.constant 0 : index
    %134 = vector.load %arg5[%c0_38, %c0_39] : memref<32x16xf32, #tpu.memory_space<vmem>>, vector<32x16xf32>
    %cst_40 = arith.constant dense<0.000000e+00> : vector<16x16xf32>
    %135 = tpu.matmul %133, %134, %cst_40 {dimension_numbers = #tpu.dot_dimension_numbers<[1], [0], [0], [1], [0, 0, 1, 1], [], []>} : vector<16x32xf32>, vector<32x16xf32>, vector<16x16xf32> -> vector<16x16xf32>
    %136 = vector.broadcast %9 : vector<1x16xf32> to vector<16x16xf32>
    %137 = arith.addf %135, %136 : vector<16x16xf32>
    %cst_41 = arith.constant 0.000000e+00 : f32
    %138 = vector.broadcast %cst_41 : f32 to vector<16x16xf32>
    %139 = arith.maximumf %137, %138 : vector<16x16xf32>
    %c0_42 = arith.constant 0 : index
    %c0_43 = arith.constant 0 : index
    %140 = vector.load %arg6[%c0_42, %c0_43] : memref<16x32xf32, #tpu.memory_space<vmem>>, vector<16x32xf32>
    %cst_44 = arith.constant dense<0.000000e+00> : vector<16x32xf32>
    %141 = tpu.matmul %139, %140, %cst_44 {dimension_numbers = #tpu.dot_dimension_numbers<[1], [0], [0], [1], [0, 0, 1, 1], [], []>} : vector<16x16xf32>, vector<16x32xf32>, vector<16x32xf32> -> vector<16x32xf32>
    %142 = vector.broadcast %10 : vector<1x32xf32> to vector<16x32xf32>
    %143 = arith.addf %141, %142 : vector<16x32xf32>
    %144 = arith.addf %133, %143 : vector<16x32xf32>
    %cst_45 = arith.constant dense<0.000000e+00> : vector<16xf32>
    %145 = vector.multi_reduction <add>, %144, %cst_45 [1] : vector<16x32xf32> to vector<16xf32>
    %146 = vector.shape_cast %145 : vector<16xf32> to vector<16x1xf32>
    %cst_46 = arith.constant 3.200000e+01 : f32
    %147 = vector.broadcast %cst_46 : f32 to vector<16x1xf32>
    %148 = arith.divf %146, %147 : vector<16x1xf32>
    %149 = vector.broadcast %148 : vector<16x1xf32> to vector<16x32xf32>
    %150 = arith.subf %144, %149 : vector<16x32xf32>
    %151 = arith.mulf %150, %150 : vector<16x32xf32>
    %cst_47 = arith.constant dense<0.000000e+00> : vector<16xf32>
    %152 = vector.multi_reduction <add>, %151, %cst_47 [1] : vector<16x32xf32> to vector<16xf32>
    %153 = vector.shape_cast %152 : vector<16xf32> to vector<16x1xf32>
    %cst_48 = arith.constant 3.200000e+01 : f32
    %154 = vector.broadcast %cst_48 : f32 to vector<16x1xf32>
    %155 = arith.divf %153, %154 : vector<16x1xf32>
    %156 = vector.broadcast %148 : vector<16x1xf32> to vector<16x32xf32>
    %157 = arith.subf %144, %156 : vector<16x32xf32>
    %cst_49 = arith.constant 9.99999974E-6 : f32
    %158 = vector.broadcast %cst_49 : f32 to vector<16x1xf32>
    %159 = arith.addf %155, %158 : vector<16x1xf32>
    %160 = math.rsqrt %159 : vector<16x1xf32>
    %161 = vector.broadcast %160 : vector<16x1xf32> to vector<16x32xf32>
    %162 = arith.mulf %157, %161 : vector<16x32xf32>
    %163 = vector.broadcast %11 : vector<1x32xf32> to vector<16x32xf32>
    %164 = arith.mulf %162, %163 : vector<16x32xf32>
    %165 = vector.broadcast %12 : vector<1x32xf32> to vector<16x32xf32>
    %166 = arith.addf %164, %165 : vector<16x32xf32>
    %c0_50 = arith.constant 0 : index
    %c0_51 = arith.constant 0 : index
    %167 = vector.load %arg8[%c0_50, %c0_51] : memref<16x32xf32, #tpu.memory_space<vmem>>, vector<16x32xf32>
    tpu.vector_store %arg8[%c0_50, %c0_51], %166 {strides = array<i32>} : memref<16x32xf32, #tpu.memory_space<vmem>>, vector<16x32xf32>,
    return
  }
  func.func @transform_0(%arg0: i32) -> (i32, i32) {
    %c0_i32 = arith.constant 0 : i32
    %c0_i32_0 = arith.constant 0 : i32
    %c0_i32_1 = arith.constant 0 : i32
    return %c0_i32, %c0_i32_0 : i32, i32
  }
  func.func @transform_1(%arg0: i32) -> (i32, i32) {
    %c0_i32 = arith.constant 0 : i32
    %c0_i32_0 = arith.constant 0 : i32
    %c0_i32_1 = arith.constant 0 : i32
    return %c0_i32, %c0_i32_0 : i32, i32
  }
  func.func @transform_2(%arg0: i32) -> (i32, i32) {
    %c0_i32 = arith.constant 0 : i32
    %c0_i32_0 = arith.constant 0 : i32
    %c0_i32_1 = arith.constant 0 : i32
    return %c0_i32, %c0_i32_0 : i32, i32
  }
  func.func @transform_3(%arg0: i32) -> (i32, i32) {
    %c0_i32 = arith.constant 0 : i32
    %c0_i32_0 = arith.constant 0 : i32
    %c0_i32_1 = arith.constant 0 : i32
    return %c0_i32, %c0_i32_0 : i32, i32
  }
  func.func @transform_4(%arg0: i32) -> (i32, i32) {
    %c0_i32 = arith.constant 0 : i32
    %c0_i32_0 = arith.constant 0 : i32
    %c0_i32_1 = arith.constant 0 : i32
    return %c0_i32, %c0_i32_0 : i32, i32
  }
  func.func @transform_5(%arg0: i32) -> (i32, i32) {
    %c0_i32 = arith.constant 0 : i32
    %c0_i32_0 = arith.constant 0 : i32
    %c0_i32_1 = arith.constant 0 : i32
    return %c0_i32, %c0_i32_0 : i32, i32
  }
  func.func @transform_6(%arg0: i32) -> (i32, i32) {
    %c0_i32 = arith.constant 0 : i32
    %c0_i32_0 = arith.constant 0 : i32
    %c0_i32_1 = arith.constant 0 : i32
    return %c0_i32, %c0_i32_0 : i32, i32
  }
  func.func @transform_7(%arg0: i32) -> (i32, i32) {
    %c0_i32 = arith.constant 0 : i32
    %c0_i32_0 = arith.constant 0 : i32
    %c0_i32_1 = arith.constant 0 : i32
    return %c0_i32, %c0_i32_0 : i32, i32
  }
}

</mosaic_0001>

<llo_original>
// kernel: tpu_custom_call.1
$region0: #{tpu_custom_call.1}
  #allocation0 [shape = 'u32[]', space=smem, size = 0x4, offset = 0x4, fixed_abs, tag = 'smem constant byte address 0x4 - core index']
  #allocation1 [shape = 'u32[144,128]{1,0:T(1,128)}', space=vmem, size = 0x12000, scoped, tag = 'internal scratch']
  %s0 = inlined_call_operand.vmem [shape: f32[48,32], index: 0, kind: input, shape index: {}]
  %s1 = inlined_call_operand.vmem [shape: f32[16,32], index: 1, kind: input, shape index: {}]
  %s2 = inlined_call_operand.vmem [shape: f32[32,96], index: 2, kind: input, shape index: {}]
  %s3 = inlined_call_operand.vmem [shape: f32[32,32], index: 3, kind: input, shape index: {}]
  %s4 = inlined_call_operand.vmem [shape: f32[32,16], index: 4, kind: input, shape index: {}]
  %s5 = inlined_call_operand.vmem [shape: f32[16,32], index: 5, kind: input, shape index: {}]
  %s6 = inlined_call_operand.vmem [shape: f32[10,32], index: 6, kind: input, shape index: {}]
  %s7 = inlined_call_operand.hbm [shape: f32[16,32], index: 7, kind: output, shape index: {}]
  %s8 = sld [smem:[#allocation0]]
  $region38: #{tpu_custom_call.1} parent=0
    _
  %s10 = ssub.s32 1, %s8
  %s11 = scalar_select 0, %s10, %s8
  $region1: #{tpu_custom_call.1} parent=0
    #allocation2 [shape = 'u8[8192]{0}', space=vmem, size = 0x2000, scoped, tag = 'output window, operand 0, single buffered']
    #allocation3 [shape = 's32[1]{0}', space=sflag, size = 0x4, scoped, tag = 'scoped memory for tpu_custom_call.1']
    %12 = vsyncpa [#allocation3], 0
    // Predicated region
    $region2: #{tpu_custom_call.1} parent=1 // pred_check
      _
    $region3: #{tpu_custom_call.1} parent=1 // pred_check_branch
      %14 = sbr.rel (0) target = $region5
    $region4: #{tpu_custom_call.1} parent=1 // pred_region
      _
    $region5: #{tpu_custom_call.1} parent=1 // pred_fallthru
      _
    // Predicated region
    $region6: #{tpu_custom_call.1} parent=1 // pred_check
      _
    $region7: #{tpu_custom_call.1} parent=1 // pred_check_branch
      %16 = sbr.rel (0) target = $region9
    $region8: #{tpu_custom_call.1} parent=1 // pred_region
      _
    $region9: #{tpu_custom_call.1} parent=1 // pred_fallthru
      _
    // Predicated region
    $region10: #{tpu_custom_call.1} parent=1 // pred_check
      _
    $region11: #{tpu_custom_call.1} parent=1 // pred_check_branch
      %18 = sbr.rel (0) target = $region13
    $region12: #{tpu_custom_call.1} parent=1 // pred_region
      _
    $region13: #{tpu_custom_call.1} parent=1 // pred_fallthru
      _
    // Predicated region
    $region14: #{tpu_custom_call.1} parent=1 // pred_check
      _
    $region15: #{tpu_custom_call.1} parent=1 // pred_check_branch
      %20 = sbr.rel (0) target = $region17
    $region16: #{tpu_custom_call.1} parent=1 // pred_region
      _
    $region17: #{tpu_custom_call.1} parent=1 // pred_fallthru
      _
    // Predicated region
    $region18: #{tpu_custom_call.1} parent=1 // pred_check
      _
    $region19: #{tpu_custom_call.1} parent=1 // pred_check_branch
      %22 = sbr.rel (0) target = $region21
    $region20: #{tpu_custom_call.1} parent=1 // pred_region
      _
    $region21: #{tpu_custom_call.1} parent=1 // pred_fallthru
      _
    // Predicated region
    $region22: #{tpu_custom_call.1} parent=1 // pred_check
      _
    $region23: #{tpu_custom_call.1} parent=1 // pred_check_branch
      %24 = sbr.rel (0) target = $region25
    $region24: #{tpu_custom_call.1} parent=1 // pred_region
      _
    $region25: #{tpu_custom_call.1} parent=1 // pred_fallthru
      _
    // Predicated region
    $region26: #{tpu_custom_call.1} parent=1 // pred_check
      _
    $region27: #{tpu_custom_call.1} parent=1 // pred_check_branch
      %26 = sbr.rel (0) target = $region29
    $region28: #{tpu_custom_call.1} parent=1 // pred_region
      _
    $region29: #{tpu_custom_call.1} parent=1 // pred_fallthru
      _
    %v27 = vld [vmem:[%s0] sm:$0xff]
    %v28 = vld [vmem:[%s0 + $0x8] sm:$0xff]
    %v29 = vld [vmem:[%s0 + $0x10] sm:$0xff]
    %v30 = vld [vmem:[%s0 + $0x18] sm:$0xff]
    %v31 = vld [vmem:[%s0 + $0x20] sm:$0xff]
    %v32 = vld [vmem:[%s0 + $0x28] sm:$0xff]
    %v33 = vld [vmem:[%s1] sm:$0xff]
    %v34 = vld [vmem:[%s1 + $0x8] sm:$0xff]
    %v35 = vld [vmem:[%s6] sm:$0xff]
    %v36 = vld [vmem:[%s6 + $0x8] sm:$0x3]
    %v37 = vld [vmem:[%s2] sm:$0xff]
    %v38 = vld [vmem:[%s2 + $0x8] sm:$0xff]
    %v39 = vld [vmem:[%s2 + $0x10] sm:$0xff]
    %v40 = vld [vmem:[%s2 + $0x18] sm:$0xff]
    %vm41 = vcmask 261120
    %v43 = vsel %vm41, %v27, 0
    %v46 = vsel %vm41, %v28, 0
    %v49 = vsel %vm41, %v29, 0
    %v52 = vsel %vm41, %v30, 0
    %v55 = vsel %vm41, %v31, 0
    %v58 = vsel %vm41, %v32, 0
    %60 = vmatprep.subr.mxu0 0.0
    %61 = vmatpush1.msra.mxu0 %v37
    %62 = vmatprep.subr.mxu0 0.0
    %63 = vmatpush1.msra.mxu0 %v38
    %64 = vmatprep.subr.mxu0 0.0
    %65 = vmatpush1.msra.mxu0 %v39
    %66 = vmatprep.subr.mxu0 0.0
    %67 = vmatpush1.msra.mxu0 %v40
    %68 = vmatprep.subr.mxu0 0.0
    %69 = vmatpush1.msra.mxu0 0.0
    %70 = vmatprep.subr.mxu0 0.0
    %71 = vmatpush1.msra.mxu0 0.0
    %72 = vmatprep.subr.mxu0 0.0
    %73 = vmatpush1.msra.mxu0 0.0
    %74 = vmatprep.subr.mxu0 0.0
    %75 = vmatpush1.msra.mxu0 0.0
    %76 = vmatprep.subr.mxu0 0.0
    %77 = vmatpush1.msra.mxu0 0.0
    %78 = vmatprep.subr.mxu0 0.0
    %79 = vmatpush1.msra.mxu0 0.0
    %80 = vmatprep.subr.mxu0 0.0
    %81 = vmatpush1.msra.mxu0 0.0
    %82 = vmatprep.subr.mxu0 0.0
    %83 = vmatpush1.msra.mxu0 0.0
    %84 = vmatprep.subr.mxu0 0.0
    %85 = vmatpush1.msra.mxu0 0.0
    %86 = vmatprep.subr.mxu0 0.0
    %87 = vmatpush1.msra.mxu0 0.0
    %88 = vmatprep.subr.mxu0 0.0
    %89 = vmatpush1.msra.mxu0 0.0
    %90 = vmatprep.subr.mxu0 0.0
    %91 = vmatpush1.msra.mxu0 0.0
    %92 = vmatprep.subr.mxu0 0.0
    %93 = vmatpush1.msra.mxu0 0.0
    %94 = vmatprep.subr.mxu0 0.0
    %95 = vmatpush1.msra.mxu0 0.0
    %96 = vmatprep.subr.mxu0 0.0
    %97 = vmatpush1.msra.mxu0 0.0
    %98 = vmatprep.subr.mxu0 0.0
    %99 = vmatpush1.msra.mxu0 0.0
    %100 = vmatprep.subr.mxu0 0.0
    %101 = vmatpush1.msra.mxu0 0.0
    %102 = vmatprep.subr.mxu0 0.0
    %103 = vmatpush1.msra.mxu0 0.0
    %104 = vmatprep.subr.mxu0 0.0
    %105 = vmatpush1.msra.mxu0 0.0
    %106 = vmatprep.subr.mxu0 0.0
    %107 = vmatpush1.msra.mxu0 0.0
    %108 = vmatprep.subr.mxu0 0.0
    %109 = vmatpush1.msra.mxu0 0.0
    %110 = vmatprep.subr.mxu0 0.0
    %111 = vmatpush1.msra.mxu0 0.0
    %112 = vmatprep.subr.mxu0 0.0
    %113 = vmatpush1.msra.mxu0 0.0
    %114 = vmatprep.subr.mxu0 0.0
    %115 = vmatpush1.msra.mxu0 0.0
    %116 = vmatprep.subr.mxu0 0.0
    %117 = vmatpush1.msra.mxu0 0.0
    %118 = vmatprep.subr.mxu0 0.0
    %119 = vmatpush1.msra.mxu0 0.0
    %120 = vmatprep.subr.mxu0 0.0
    %121 = vmatpush1.msra.mxu0 0.0
    %122 = vmatprep.subr.mxu0 0.0
    %123 = vmatpush1.msra.mxu0 0.0
    %124 = vmatprep.mubr.f32.mxu0 0.0
    %125 = vmatmul.mubr.f32.gmra.mrb[0].mxu0 %v43
    %v126 = vpop.f32.mrb[0].mxu0
    %v127 = vadd.f32 0.0, %v126
    %v128 = vpop.f32.mrb[0].mxu0
    %129 = vmatprep.mubr.f32.mxu0 0.0
    %130 = vmatmul.mubr.f32.gmra.mrb[0].mxu0 %v46
    %v131 = vpop.f32.mrb[0].mxu0
    %v132 = vadd.f32 0.0, %v131
    %v133 = vpop.f32.mrb[0].mxu0
    %134 = vmatprep.mubr.f32.mxu0 0.0
    %135 = vmatmul.mubr.f32.gmra.mrb[0].mxu0 %v49
    %v136 = vpop.f32.mrb[0].mxu0
    %v137 = vadd.f32 0.0, %v136
    %v138 = vpop.f32.mrb[0].mxu0
    %139 = vmatprep.mubr.f32.mxu0 0.0
    %140 = vmatmul.mubr.f32.gmra.mrb[0].mxu0 %v52
    %v141 = vpop.f32.mrb[0].mxu0
    %v142 = vadd.f32 0.0, %v141
    %v143 = vpop.f32.mrb[0].mxu0
    %144 = vmatprep.mubr.f32.mxu0 0.0
    %145 = vmatmul.mubr.f32.gmra.mrb[0].mxu0 %v55
    %v146 = vpop.f32.mrb[0].mxu0
    %v147 = vadd.f32 0.0, %v146
    %v148 = vpop.f32.mrb[0].mxu0
    %149 = vmatprep.mubr.f32.mxu0 0.0
    %150 = vmatmul.mubr.f32.gmra.mrb[0].mxu0 %v58
    %v151 = vpop.f32.mrb[0].mxu0
    %v152 = vadd.f32 0.0, %v151
    %v153 = vpop.f32.mrb[0].mxu0
    %154 = vdwg.mxu0
    %v155 = vlaneseq
    %v156 = vshrl.u32 %v155, 7
    %v157 = vsub.s32 0, %v156
    %v158 = vrot.slane %v35, %v157
    %v159 = vadd.f32 %v127, %v158
    %v160 = vadd.f32 %v132, %v158
    %v161 = vlaneseq
    %v162 = vshrl.u32 %v161, 7
    %v163 = vsub.s32 1, %v162
    %v164 = vrot.slane %v35, %v163
    %166 = vrot.lane.b32.xlu0 %v164, 32
    %v167 = vpop.permute.xlu0 %166
    %v169 = vadd.f32 %v137, %v167
    %v170 = vadd.f32 %v142, %v167
    %v171 = vadd.f32 %v147, %v167
    %v172 = vadd.f32 %v152, %v167
    %v173 = vlaneseq
    %v174 = vshrl.u32 %v173, 7
    %v175 = vsub.s32 2, %v174
    %v176 = vrot.slane %v35, %v175
    %178 = vrot.lane.b32.xlu0 %v176, 64
    %v179 = vpop.permute.xlu0 %178
    %v181 = vadd.f32 %v137, %v179
    %v182 = vadd.f32 %v142, %v179
    %v183 = vadd.f32 %v147, %v179
    %v184 = vadd.f32 %v152, %v179
    %v185 = vld [vmem:[%s3] sm:$0xff]
    %v186 = vld [vmem:[%s3 + $0x8] sm:$0xff]
    %v187 = vld [vmem:[%s3 + $0x10] sm:$0xff]
    %v188 = vld [vmem:[%s3 + $0x18] sm:$0xff]
    %v189 = vlaneseq
    %v190 = vshrl.u32 %v189, 7
    %v191 = vsub.s32 3, %v190
    %v192 = vrot.slane %v35, %v191
    %v193 = vadd.f32 %v27, %v192
    %v194 = vadd.f32 %v28, %v192
    %199 = vrot.lane.b32.xlu0 %v169, 96
    %v200 = vpop.permute.xlu0 %199
    %201 = vrot.lane.b32.xlu0 %v170, 96
    %v202 = vpop.permute.xlu0 %201
    %203 = vrot.lane.b32.xlu0 %v171, 96
    %v204 = vpop.permute.xlu0 %203
    %205 = vrot.lane.b32.xlu0 %v172, 96
    %v206 = vpop.permute.xlu0 %205
    %vm207 = vcmask 64512
    %v209 = vsel %vm207, %v159, 0
    %v212 = vsel %vm207, %v160, 0
    %v214 = vsel %vm207, %v200, 0
    %v216 = vsel %vm207, %v202, 0
    %v218 = vsel %vm207, %v204, 0
    %v220 = vsel %vm207, %v206, 0
    %222 = vmatprep.subr.mxu0 0.0
    %223 = vmatpush1.xpose.msra.mxu0 %v214
    %224 = vmatprep.subr.mxu0 0.0
    %225 = vmatpush1.xpose.msra.mxu0 %v216
    %226 = vmatprep.subr.mxu0 0.0
    %227 = vmatpush1.xpose.msra.mxu0 %v218
    %228 = vmatprep.subr.mxu0 0.0
    %229 = vmatpush1.xpose.msra.mxu0 %v220
    %230 = vmatprep.subr.mxu0 0.0
    %231 = vmatpush1.xpose.msra.mxu0 0.0
    %232 = vmatprep.subr.mxu0 0.0
    %233 = vmatpush1.xpose.msra.mxu0 0.0
    %234 = vmatprep.subr.mxu0 0.0
    %235 = vmatpush1.xpose.msra.mxu0 0.0
    %236 = vmatprep.subr.mxu0 0.0
    %237 = vmatpush1.xpose.msra.mxu0 0.0
    %238 = vmatprep.subr.mxu0 0.0
    %239 = vmatpush1.xpose.msra.mxu0 0.0
    %240 = vmatprep.subr.mxu0 0.0
    %241 = vmatpush1.xpose.msra.mxu0 0.0
    %242 = vmatprep.subr.mxu0 0.0
    %243 = vmatpush1.xpose.msra.mxu0 0.0
    %244 = vmatprep.subr.mxu0 0.0
    %245 = vmatpush1.xpose.msra.mxu0 0.0
    %246 = vmatprep.subr.mxu0 0.0
    %247 = vmatpush1.xpose.msra.mxu0 0.0
    %248 = vmatprep.subr.mxu0 0.0
    %249 = vmatpush1.xpose.msra.mxu0 0.0
    %250 = vmatprep.subr.mxu0 0.0
    %251 = vmatpush1.xpose.msra.mxu0 0.0
    %252 = vmatprep.subr.mxu0 0.0
    %253 = vmatpush1.xpose.msra.mxu0 0.0
    %254 = vmatprep.subr.mxu0 0.0
    %255 = vmatpush1.xpose.msra.mxu0 0.0
    %256 = vmatprep.subr.mxu0 0.0
    %257 = vmatpush1.xpose.msra.mxu0 0.0
    %258 = vmatprep.subr.mxu0 0.0
    %259 = vmatpush1.xpose.msra.mxu0 0.0
    %260 = vmatprep.subr.mxu0 0.0
    %261 = vmatpush1.xpose.msra.mxu0 0.0
    %262 = vmatprep.subr.mxu0 0.0
    %263 = vmatpush1.xpose.msra.mxu0 0.0
    %264 = vmatprep.subr.mxu0 0.0
    %265 = vmatpush1.xpose.msra.mxu0 0.0
    %266 = vmatprep.subr.mxu0 0.0
    %267 = vmatpush1.xpose.msra.mxu0 0.0
    %268 = vmatprep.subr.mxu0 0.0
    %269 = vmatpush1.xpose.msra.mxu0 0.0
    %270 = vmatprep.subr.mxu0 0.0
    %271 = vmatpush1.xpose.msra.mxu0 0.0
    %272 = vmatprep.subr.mxu0 0.0
    %273 = vmatpush1.xpose.msra.mxu0 0.0
    %274 = vmatprep.subr.mxu0 0.0
    %275 = vmatpush1.xpose.msra.mxu0 0.0
    %276 = vmatprep.subr.mxu0 0.0
    %277 = vmatpush1.xpose.msra.mxu0 0.0
    %278 = vmatprep.subr.mxu0 0.0
    %279 = vmatpush1.xpose.msra.mxu0 0.0
    %280 = vmatprep.subr.mxu0 0.0
    %281 = vmatpush1.xpose.msra.mxu0 0.0
    %282 = vmatprep.subr.mxu0 0.0
    %283 = vmatpush1.xpose.msra.mxu0 0.0
    %284 = vmatprep.subr.mxu0 0.0
    %285 = vmatpush1.xpose.msra.mxu0 0.0
    %286 = vmatprep.mubr.f32.mxu0 0.0
    %287 = vmatmul.mubr.f32.gmra.mrb[0].mxu0 %v209
    %v288 = vpop.f32.mrb[0].mxu0
    %v289 = vadd.f32 0.0, %v288
    %v290 = vpop.f32.mrb[0].mxu0
    %291 = vmatprep.mubr.f32.mxu0 0.0
    %292 = vmatmul.mubr.f32.gmra.mrb[0].mxu0 %v212
    %v293 = vpop.f32.mrb[0].mxu0
    %v294 = vadd.f32 0.0, %v293
    %v295 = vpop.f32.mrb[0].mxu0
    %296 = vdwg.mxu0
    %v297 = vmul.f32 %v289, 0.35355338
    %v298 = vmul.f32 %v294, 0.35355338
    %v299 = vadd.f32 %v297, %v33
    %v300 = vadd.f32 %v298, %v34
    %v301 = vsel %vm41, %v299, -inf
    %302 = vmax.xlane.f32.xlu0 %v301
    %v303 = vpop.xlane.xlu0 %302
    %v304 = vsel %vm41, %v300, -inf
    %305 = vmax.xlane.f32.xlu0 %v304
    %v306 = vpop.xlane.xlu0 %305
    %v307 = vsub.f32 %v299, %v303
    %v308 = vsub.f32 %v300, %v306
    %v309 = vmul.f32 %v307, 1.442695
    %v310 = vpow.pop %v309
    %v311 = vmul.f32 %v308, 1.442695
    %v312 = vpow.pop %v311
    %v313 = vsel %vm41, %v310, 0.0
    %314 = vadd.xlane.f32.xlu0 %v313
    %v315 = vpop.xlane.xlu0 %314
    %v316 = vsel %vm41, %v312, 0.0
    %317 = vadd.xlane.f32.xlu0 %v316
    %v318 = vpop.xlane.xlu0 %317
    %v319 = vrcp.pop %v315
    %v320 = vrcp.pop %v318
    %v321 = vmul.f32 %v310, %v319
    %v322 = vmul.f32 %v312, %v320
    %327 = vrot.lane.b32.xlu0 %v181, 64
    %v328 = vpop.permute.xlu0 %327
    %329 = vrot.lane.b32.xlu0 %v182, 64
    %v330 = vpop.permute.xlu0 %329
    %331 = vrot.lane.b32.xlu0 %v183, 64
    %v332 = vpop.permute.xlu0 %331
    %333 = vrot.lane.b32.xlu0 %v184, 64
    %v334 = vpop.permute.xlu0 %333
    %v340 = vsel %vm41, %v321, 0
    %v343 = vsel %vm41, %v322, 0
    %345 = vmatprep.subr.mxu0 0.0
    %346 = vmatpush1.msra.mxu0 %v328
    %347 = vmatprep.subr.mxu0 0.0
    %348 = vmatpush1.msra.mxu0 %v330
    %349 = vmatprep.subr.mxu0 0.0
    %350 = vmatpush1.msra.mxu0 %v332
    %351 = vmatprep.subr.mxu0 0.0
    %352 = vmatpush1.msra.mxu0 %v334
    %353 = vmatprep.subr.mxu0 0.0
    %354 = vmatpush1.msra.mxu0 0.0
    %355 = vmatprep.subr.mxu0 0.0
    %356 = vmatpush1.msra.mxu0 0.0
    %357 = vmatprep.subr.mxu0 0.0
    %358 = vmatpush1.msra.mxu0 0.0
    %359 = vmatprep.subr.mxu0 0.0
    %360 = vmatpush1.msra.mxu0 0.0
    %361 = vmatprep.subr.mxu0 0.0
    %362 = vmatpush1.msra.mxu0 0.0
    %363 = vmatprep.subr.mxu0 0.0
    %364 = vmatpush1.msra.mxu0 0.0
    %365 = vmatprep.subr.mxu0 0.0
    %366 = vmatpush1.msra.mxu0 0.0
    %367 = vmatprep.subr.mxu0 0.0
    %368 = vmatpush1.msra.mxu0 0.0
    %369 = vmatprep.subr.mxu0 0.0
    %370 = vmatpush1.msra.mxu0 0.0
    %371 = vmatprep.subr.mxu0 0.0
    %372 = vmatpush1.msra.mxu0 0.0
    %373 = vmatprep.subr.mxu0 0.0
    %374 = vmatpush1.msra.mxu0 0.0
    %375 = vmatprep.subr.mxu0 0.0
    %376 = vmatpush1.msra.mxu0 0.0
    %377 = vmatprep.subr.mxu0 0.0
    %378 = vmatpush1.msra.mxu0 0.0
    %379 = vmatprep.subr.mxu0 0.0
    %380 = vmatpush1.msra.mxu0 0.0
    %381 = vmatprep.subr.mxu0 0.0
    %382 = vmatpush1.msra.mxu0 0.0
    %383 = vmatprep.subr.mxu0 0.0
    %384 = vmatpush1.msra.mxu0 0.0
    %385 = vmatprep.subr.mxu0 0.0
    %386 = vmatpush1.msra.mxu0 0.0
    %387 = vmatprep.subr.mxu0 0.0
    %388 = vmatpush1.msra.mxu0 0.0
    %389 = vmatprep.subr.mxu0 0.0
    %390 = vmatpush1.msra.mxu0 0.0
    %391 = vmatprep.subr.mxu0 0.0
    %392 = vmatpush1.msra.mxu0 0.0
    %393 = vmatprep.subr.mxu0 0.0
    %394 = vmatpush1.msra.mxu0 0.0
    %395 = vmatprep.subr.mxu0 0.0
    %396 = vmatpush1.msra.mxu0 0.0
    %397 = vmatprep.subr.mxu0 0.0
    %398 = vmatpush1.msra.mxu0 0.0
    %399 = vmatprep.subr.mxu0 0.0
    %400 = vmatpush1.msra.mxu0 0.0
    %401 = vmatprep.subr.mxu0 0.0
    %402 = vmatpush1.msra.mxu0 0.0
    %403 = vmatprep.subr.mxu0 0.0
    %404 = vmatpush1.msra.mxu0 0.0
    %405 = vmatprep.subr.mxu0 0.0
    %406 = vmatpush1.msra.mxu0 0.0
    %407 = vmatprep.subr.mxu0 0.0
    %408 = vmatpush1.msra.mxu0 0.0
    %409 = vmatprep.mubr.f32.mxu0 0.0
    %410 = vmatmul.mubr.f32.gmra.mrb[0].mxu0 %v340
    %v411 = vpop.f32.mrb[0].mxu0
    %v412 = vadd.f32 0.0, %v411
    %v413 = vpop.f32.mrb[0].mxu0
    %414 = vmatprep.mubr.f32.mxu0 0.0
    %415 = vmatmul.mubr.f32.gmra.mrb[0].mxu0 %v343
    %v416 = vpop.f32.mrb[0].mxu0
    %v417 = vadd.f32 0.0, %v416
    %v418 = vpop.f32.mrb[0].mxu0
    %419 = vdwg.mxu0
    %v421 = vsel %vm207, %v412, 0
    %v424 = vsel %vm207, %v417, 0
    %426 = vmatprep.subr.mxu0 0.0
    %427 = vmatpush1.msra.mxu0 %v185
    %428 = vmatprep.subr.mxu0 0.0
    %429 = vmatpush1.msra.mxu0 0.0
    %430 = vmatprep.subr.mxu0 0.0
    %431 = vmatpush1.msra.mxu0 0.0
    %432 = vmatprep.subr.mxu0 0.0
    %433 = vmatpush1.msra.mxu0 0.0
    %434 = vmatprep.subr.mxu0 0.0
    %435 = vmatpush1.msra.mxu0 0.0
    %436 = vmatprep.subr.mxu0 0.0
    %437 = vmatpush1.msra.mxu0 0.0
    %438 = vmatprep.subr.mxu0 0.0
    %439 = vmatpush1.msra.mxu0 0.0
    %440 = vmatprep.subr.mxu0 0.0
    %441 = vmatpush1.msra.mxu0 0.0
    %442 = vmatprep.subr.mxu0 0.0
    %443 = vmatpush1.msra.mxu0 0.0
    %444 = vmatprep.subr.mxu0 0.0
    %445 = vmatpush1.msra.mxu0 0.0
    %446 = vmatprep.subr.mxu0 0.0
    %447 = vmatpush1.msra.mxu0 0.0
    %448 = vmatprep.subr.mxu0 0.0
    %449 = vmatpush1.msra.mxu0 0.0
    %450 = vmatprep.subr.mxu0 0.0
    %451 = vmatpush1.msra.mxu0 0.0
    %452 = vmatprep.subr.mxu0 0.0
    %453 = vmatpush1.msra.mxu0 0.0
    %454 = vmatprep.subr.mxu0 0.0
    %455 = vmatpush1.msra.mxu0 0.0
    %456 = vmatprep.subr.mxu0 0.0
    %457 = vmatpush1.msra.mxu0 0.0
    %458 = vmatprep.subr.mxu0 0.0
    %459 = vmatpush1.msra.mxu0 0.0
    %460 = vmatprep.subr.mxu0 0.0
    %461 = vmatpush1.msra.mxu0 0.0
    %462 = vmatprep.subr.mxu0 0.0
    %463 = vmatpush1.msra.mxu0 0.0
    %464 = vmatprep.subr.mxu0 0.0
    %465 = vmatpush1.msra.mxu0 0.0
    %466 = vmatprep.subr.mxu0 0.0
    %467 = vmatpush1.msra.mxu0 0.0
    %468 = vmatprep.subr.mxu0 0.0
    %469 = vmatpush1.msra.mxu0 0.0
    %470 = vmatprep.subr.mxu0 0.0
    %471 = vmatpush1.msra.mxu0 0.0
    %472 = vmatprep.subr.mxu0 0.0
    %473 = vmatpush1.msra.mxu0 0.0
    %474 = vmatprep.subr.mxu0 0.0
    %475 = vmatpush1.msra.mxu0 0.0
    %476 = vmatprep.subr.mxu0 0.0
    %477 = vmatpush1.msra.mxu0 0.0
    %478 = vmatprep.subr.mxu0 0.0
    %479 = vmatpush1.msra.mxu0 0.0
    %480 = vmatprep.subr.mxu0 0.0
    %481 = vmatpush1.msra.mxu0 0.0
    %482 = vmatprep.subr.mxu0 0.0
    %483 = vmatpush1.msra.mxu0 0.0
    %484 = vmatprep.subr.mxu0 0.0
    %485 = vmatpush1.msra.mxu0 0.0
    %486 = vmatprep.subr.mxu0 0.0
    %487 = vmatpush1.msra.mxu0 0.0
    %488 = vmatprep.subr.mxu0 0.0
    %489 = vmatpush1.msra.mxu0 0.0
    %490 = vmatprep.mubr.f32.mxu0 0.0
    %491 = vmatmul.mubr.f32.gmra.mrb[0].mxu0 %v421
    %v492 = vpop.f32.mrb[0].mxu0
    %v493 = vadd.f32 0.0, %v492
    %v494 = vpop.f32.mrb[0].mxu0
    %495 = vmatprep.mubr.f32.mxu0 0.0
    %496 = vmatmul.mubr.f32.gmra.mrb[0].mxu0 %v424
    %v497 = vpop.f32.mrb[0].mxu0
    %v498 = vadd.f32 0.0, %v497
    %v499 = vpop.f32.mrb[0].mxu0
    %500 = vdwg.mxu0
    %v501 = vadd.f32 %v193, %v493
    %v502 = vadd.f32 %v194, %v498
    %503 = vrot.lane.b32.xlu0 %v159, 120
    %v504 = vpop.permute.xlu0 %503
    %505 = vrot.lane.b32.xlu0 %v160, 120
    %v506 = vpop.permute.xlu0 %505
    %507 = vrot.lane.b32.xlu0 %v169, 88
    %v508 = vpop.permute.xlu0 %507
    %509 = vrot.lane.b32.xlu0 %v170, 88
    %v510 = vpop.permute.xlu0 %509
    %511 = vrot.lane.b32.xlu0 %v171, 88
    %v512 = vpop.permute.xlu0 %511
    %513 = vrot.lane.b32.xlu0 %v172, 88
    %v514 = vpop.permute.xlu0 %513
    %v515 = vsel %vm207, %v504, 0
    %v517 = vsel %vm207, %v506, 0
    %v519 = vsel %vm207, %v508, 0
    %v521 = vsel %vm207, %v510, 0
    %v523 = vsel %vm207, %v512, 0
    %v525 = vsel %vm207, %v514, 0
    %527 = vmatprep.subr.mxu0 0.0
    %528 = vmatpush1.xpose.msra.mxu0 %v519
    %529 = vmatprep.subr.mxu0 0.0
    %530 = vmatpush1.xpose.msra.mxu0 %v521
    %531 = vmatprep.subr.mxu0 0.0
    %532 = vmatpush1.xpose.msra.mxu0 %v523
    %533 = vmatprep.subr.mxu0 0.0
    %534 = vmatpush1.xpose.msra.mxu0 %v525
    %535 = vmatprep.subr.mxu0 0.0
    %536 = vmatpush1.xpose.msra.mxu0 0.0
    %537 = vmatprep.subr.mxu0 0.0
    %538 = vmatpush1.xpose.msra.mxu0 0.0
    %539 = vmatprep.subr.mxu0 0.0
    %540 = vmatpush1.xpose.msra.mxu0 0.0
    %541 = vmatprep.subr.mxu0 0.0
    %542 = vmatpush1.xpose.msra.mxu0 0.0
    %543 = vmatprep.subr.mxu0 0.0
    %544 = vmatpush1.xpose.msra.mxu0 0.0
    %545 = vmatprep.subr.mxu0 0.0
    %546 = vmatpush1.xpose.msra.mxu0 0.0
    %547 = vmatprep.subr.mxu0 0.0
    %548 = vmatpush1.xpose.msra.mxu0 0.0
    %549 = vmatprep.subr.mxu0 0.0
    %550 = vmatpush1.xpose.msra.mxu0 0.0
    %551 = vmatprep.subr.mxu0 0.0
    %552 = vmatpush1.xpose.msra.mxu0 0.0
    %553 = vmatprep.subr.mxu0 0.0
    %554 = vmatpush1.xpose.msra.mxu0 0.0
    %555 = vmatprep.subr.mxu0 0.0
    %556 = vmatpush1.xpose.msra.mxu0 0.0
    %557 = vmatprep.subr.mxu0 0.0
    %558 = vmatpush1.xpose.msra.mxu0 0.0
    %559 = vmatprep.subr.mxu0 0.0
    %560 = vmatpush1.xpose.msra.mxu0 0.0
    %561 = vmatprep.subr.mxu0 0.0
    %562 = vmatpush1.xpose.msra.mxu0 0.0
    %563 = vmatprep.subr.mxu0 0.0
    %564 = vmatpush1.xpose.msra.mxu0 0.0
    %565 = vmatprep.subr.mxu0 0.0
    %566 = vmatpush1.xpose.msra.mxu0 0.0
    %567 = vmatprep.subr.mxu0 0.0
    %568 = vmatpush1.xpose.msra.mxu0 0.0
    %569 = vmatprep.subr.mxu0 0.0
    %570 = vmatpush1.xpose.msra.mxu0 0.0
    %571 = vmatprep.subr.mxu0 0.0
    %572 = vmatpush1.xpose.msra.mxu0 0.0
    %573 = vmatprep.subr.mxu0 0.0
    %574 = vmatpush1.xpose.msra.mxu0 0.0
    %575 = vmatprep.subr.mxu0 0.0
    %576 = vmatpush1.xpose.msra.mxu0 0.0
    %577 = vmatprep.subr.mxu0 0.0
    %578 = vmatpush1.xpose.msra.mxu0 0.0
    %579 = vmatprep.subr.mxu0 0.0
    %580 = vmatpush1.xpose.msra.mxu0 0.0
    %581 = vmatprep.subr.mxu0 0.0
    %582 = vmatpush1.xpose.msra.mxu0 0.0
    %583 = vmatprep.subr.mxu0 0.0
    %584 = vmatpush1.xpose.msra.mxu0 0.0
    %585 = vmatprep.subr.mxu0 0.0
    %586 = vmatpush1.xpose.msra.mxu0 0.0
    %587 = vmatprep.subr.mxu0 0.0
    %588 = vmatpush1.xpose.msra.mxu0 0.0
    %589 = vmatprep.subr.mxu0 0.0
    %590 = vmatpush1.xpose.msra.mxu0 0.0
    %591 = vmatprep.mubr.f32.mxu0 0.0
    %592 = vmatmul.mubr.f32.gmra.mrb[0].mxu0 %v515
    %v593 = vpop.f32.mrb[0].mxu0
    %v594 = vadd.f32 0.0, %v593
    %v595 = vpop.f32.mrb[0].mxu0
    %596 = vmatprep.mubr.f32.mxu0 0.0
    %597 = vmatmul.mubr.f32.gmra.mrb[0].mxu0 %v517
    %v598 = vpop.f32.mrb[0].mxu0
    %v599 = vadd.f32 0.0, %v598
    %v600 = vpop.f32.mrb[0].mxu0
    %601 = vdwg.mxu0
    %v602 = vmul.f32 %v594, 0.35355338
    %v603 = vmul.f32 %v599, 0.35355338
    %v604 = vadd.f32 %v602, %v33
    %v605 = vadd.f32 %v603, %v34
    %v606 = vsel %vm41, %v604, -inf
    %607 = vmax.xlane.f32.xlu0 %v606
    %v608 = vpop.xlane.xlu0 %607
    %v609 = vsel %vm41, %v605, -inf
    %610 = vmax.xlane.f32.xlu0 %v609
    %v611 = vpop.xlane.xlu0 %610
    %v612 = vsub.f32 %v604, %v608
    %v613 = vsub.f32 %v605, %v611
    %v614 = vmul.f32 %v612, 1.442695
    %v615 = vpow.pop %v614
    %v616 = vmul.f32 %v613, 1.442695
    %v617 = vpow.pop %v616
    %v618 = vsel %vm41, %v615, 0.0
    %619 = vadd.xlane.f32.xlu0 %v618
    %v620 = vpop.xlane.xlu0 %619
    %v621 = vsel %vm41, %v617, 0.0
    %622 = vadd.xlane.f32.xlu0 %v621
    %v623 = vpop.xlane.xlu0 %622
    %v624 = vrcp.pop %v620
    %v625 = vrcp.pop %v623
    %v626 = vmul.f32 %v615, %v624
    %v627 = vmul.f32 %v617, %v625
    %628 = vrot.lane.b32.xlu0 %v181, 56
    %v629 = vpop.permute.xlu0 %628
    %630 = vrot.lane.b32.xlu0 %v182, 56
    %v631 = vpop.permute.xlu0 %630
    %632 = vrot.lane.b32.xlu0 %v183, 56
    %v633 = vpop.permute.xlu0 %632
    %634 = vrot.lane.b32.xlu0 %v184, 56
    %v635 = vpop.permute.xlu0 %634
    %v641 = vsel %vm41, %v626, 0
    %v644 = vsel %vm41, %v627, 0
    %646 = vmatprep.subr.mxu0 0.0
    %647 = vmatpush1.msra.mxu0 %v629
    %648 = vmatprep.subr.mxu0 0.0
    %649 = vmatpush1.msra.mxu0 %v631
    %650 = vmatprep.subr.mxu0 0.0
    %651 = vmatpush1.msra.mxu0 %v633
    %652 = vmatprep.subr.mxu0 0.0
    %653 = vmatpush1.msra.mxu0 %v635
    %654 = vmatprep.subr.mxu0 0.0
    %655 = vmatpush1.msra.mxu0 0.0
    %656 = vmatprep.subr.mxu0 0.0
    %657 = vmatpush1.msra.mxu0 0.0
    %658 = vmatprep.subr.mxu0 0.0
    %659 = vmatpush1.msra.mxu0 0.0
    %660 = vmatprep.subr.mxu0 0.0
    %661 = vmatpush1.msra.mxu0 0.0
    %662 = vmatprep.subr.mxu0 0.0
    %663 = vmatpush1.msra.mxu0 0.0
    %664 = vmatprep.subr.mxu0 0.0
    %665 = vmatpush1.msra.mxu0 0.0
    %666 = vmatprep.subr.mxu0 0.0
    %667 = vmatpush1.msra.mxu0 0.0
    %668 = vmatprep.subr.mxu0 0.0
    %669 = vmatpush1.msra.mxu0 0.0
    %670 = vmatprep.subr.mxu0 0.0
    %671 = vmatpush1.msra.mxu0 0.0
    %672 = vmatprep.subr.mxu0 0.0
    %673 = vmatpush1.msra.mxu0 0.0
    %674 = vmatprep.subr.mxu0 0.0
    %675 = vmatpush1.msra.mxu0 0.0
    %676 = vmatprep.subr.mxu0 0.0
    %677 = vmatpush1.msra.mxu0 0.0
    %678 = vmatprep.subr.mxu0 0.0
    %679 = vmatpush1.msra.mxu0 0.0
    %680 = vmatprep.subr.mxu0 0.0
    %681 = vmatpush1.msra.mxu0 0.0
    %682 = vmatprep.subr.mxu0 0.0
    %683 = vmatpush1.msra.mxu0 0.0
    %684 = vmatprep.subr.mxu0 0.0
    %685 = vmatpush1.msra.mxu0 0.0
    %686 = vmatprep.subr.mxu0 0.0
    %687 = vmatpush1.msra.mxu0 0.0
    %688 = vmatprep.subr.mxu0 0.0
    %689 = vmatpush1.msra.mxu0 0.0
    %690 = vmatprep.subr.mxu0 0.0
    %691 = vmatpush1.msra.mxu0 0.0
    %692 = vmatprep.subr.mxu0 0.0
    %693 = vmatpush1.msra.mxu0 0.0
    %694 = vmatprep.subr.mxu0 0.0
    %695 = vmatpush1.msra.mxu0 0.0
    %696 = vmatprep.subr.mxu0 0.0
    %697 = vmatpush1.msra.mxu0 0.0
    %698 = vmatprep.subr.mxu0 0.0
    %699 = vmatpush1.msra.mxu0 0.0
    %700 = vmatprep.subr.mxu0 0.0
    %701 = vmatpush1.msra.mxu0 0.0
    %702 = vmatprep.subr.mxu0 0.0
    %703 = vmatpush1.msra.mxu0 0.0
    %704 = vmatprep.subr.mxu0 0.0
    %705 = vmatpush1.msra.mxu0 0.0
    %706 = vmatprep.subr.mxu0 0.0
    %707 = vmatpush1.msra.mxu0 0.0
    %708 = vmatprep.subr.mxu0 0.0
    %709 = vmatpush1.msra.mxu0 0.0
    %710 = vmatprep.mubr.f32.mxu0 0.0
    %711 = vmatmul.mubr.f32.gmra.mrb[0].mxu0 %v641
    %v712 = vpop.f32.mrb[0].mxu0
    %v713 = vadd.f32 0.0, %v712
    %v714 = vpop.f32.mrb[0].mxu0
    %715 = vmatprep.mubr.f32.mxu0 0.0
    %716 = vmatmul.mubr.f32.gmra.mrb[0].mxu0 %v644
    %v717 = vpop.f32.mrb[0].mxu0
    %v718 = vadd.f32 0.0, %v717
    %v719 = vpop.f32.mrb[0].mxu0
    %720 = vdwg.mxu0
    %v722 = vsel %vm207, %v713, 0
    %v725 = vsel %vm207, %v718, 0
    %727 = vmatprep.subr.mxu0 0.0
    %728 = vmatpush1.msra.mxu0 %v186
    %729 = vmatprep.subr.mxu0 0.0
    %730 = vmatpush1.msra.mxu0 0.0
    %731 = vmatprep.subr.mxu0 0.0
    %732 = vmatpush1.msra.mxu0 0.0
    %733 = vmatprep.subr.mxu0 0.0
    %734 = vmatpush1.msra.mxu0 0.0
    %735 = vmatprep.subr.mxu0 0.0
    %736 = vmatpush1.msra.mxu0 0.0
    %737 = vmatprep.subr.mxu0 0.0
    %738 = vmatpush1.msra.mxu0 0.0
    %739 = vmatprep.subr.mxu0 0.0
    %740 = vmatpush1.msra.mxu0 0.0
    %741 = vmatprep.subr.mxu0 0.0
    %742 = vmatpush1.msra.mxu0 0.0
    %743 = vmatprep.subr.mxu0 0.0
    %744 = vmatpush1.msra.mxu0 0.0
    %745 = vmatprep.subr.mxu0 0.0
    %746 = vmatpush1.msra.mxu0 0.0
    %747 = vmatprep.subr.mxu0 0.0
    %748 = vmatpush1.msra.mxu0 0.0
    %749 = vmatprep.subr.mxu0 0.0
    %750 = vmatpush1.msra.mxu0 0.0
    %751 = vmatprep.subr.mxu0 0.0
    %752 = vmatpush1.msra.mxu0 0.0
    %753 = vmatprep.subr.mxu0 0.0
    %754 = vmatpush1.msra.mxu0 0.0
    %755 = vmatprep.subr.mxu0 0.0
    %756 = vmatpush1.msra.mxu0 0.0
    %757 = vmatprep.subr.mxu0 0.0
    %758 = vmatpush1.msra.mxu0 0.0
    %759 = vmatprep.subr.mxu0 0.0
    %760 = vmatpush1.msra.mxu0 0.0
    %761 = vmatprep.subr.mxu0 0.0
    %762 = vmatpush1.msra.mxu0 0.0
    %763 = vmatprep.subr.mxu0 0.0
    %764 = vmatpush1.msra.mxu0 0.0
    %765 = vmatprep.subr.mxu0 0.0
    %766 = vmatpush1.msra.mxu0 0.0
    %767 = vmatprep.subr.mxu0 0.0
    %768 = vmatpush1.msra.mxu0 0.0
    %769 = vmatprep.subr.mxu0 0.0
    %770 = vmatpush1.msra.mxu0 0.0
    %771 = vmatprep.subr.mxu0 0.0
    %772 = vmatpush1.msra.mxu0 0.0
    %773 = vmatprep.subr.mxu0 0.0
    %774 = vmatpush1.msra.mxu0 0.0
    %775 = vmatprep.subr.mxu0 0.0
    %776 = vmatpush1.msra.mxu0 0.0
    %777 = vmatprep.subr.mxu0 0.0
    %778 = vmatpush1.msra.mxu0 0.0
    %779 = vmatprep.subr.mxu0 0.0
    %780 = vmatpush1.msra.mxu0 0.0
    %781 = vmatprep.subr.mxu0 0.0
    %782 = vmatpush1.msra.mxu0 0.0
    %783 = vmatprep.subr.mxu0 0.0
    %784 = vmatpush1.msra.mxu0 0.0
    %785 = vmatprep.subr.mxu0 0.0
    %786 = vmatpush1.msra.mxu0 0.0
    %787 = vmatprep.subr.mxu0 0.0
    %788 = vmatpush1.msra.mxu0 0.0
    %789 = vmatprep.subr.mxu0 0.0
    %790 = vmatpush1.msra.mxu0 0.0
    %791 = vmatprep.mubr.f32.mxu0 0.0
    %792 = vmatmul.mubr.f32.gmra.mrb[0].mxu0 %v722
    %v793 = vpop.f32.mrb[0].mxu0
    %v794 = vadd.f32 0.0, %v793
    %v795 = vpop.f32.mrb[0].mxu0
    %796 = vmatprep.mubr.f32.mxu0 0.0
    %797 = vmatmul.mubr.f32.gmra.mrb[0].mxu0 %v725
    %v798 = vpop.f32.mrb[0].mxu0
    %v799 = vadd.f32 0.0, %v798
    %v800 = vpop.f32.mrb[0].mxu0
    %801 = vdwg.mxu0
    %v802 = vadd.f32 %v501, %v794
    %v803 = vadd.f32 %v502, %v799
    %804 = vrot.lane.b32.xlu0 %v159, 112
    %v805 = vpop.permute.xlu0 %804
    %806 = vrot.lane.b32.xlu0 %v160, 112
    %v807 = vpop.permute.xlu0 %806
    %808 = vrot.lane.b32.xlu0 %v169, 80
    %v809 = vpop.permute.xlu0 %808
    %810 = vrot.lane.b32.xlu0 %v170, 80
    %v811 = vpop.permute.xlu0 %810
    %812 = vrot.lane.b32.xlu0 %v171, 80
    %v813 = vpop.permute.xlu0 %812
    %814 = vrot.lane.b32.xlu0 %v172, 80
    %v815 = vpop.permute.xlu0 %814
    %v816 = vsel %vm207, %v805, 0
    %v818 = vsel %vm207, %v807, 0
    %v820 = vsel %vm207, %v809, 0
    %v822 = vsel %vm207, %v811, 0
    %v824 = vsel %vm207, %v813, 0
    %v826 = vsel %vm207, %v815, 0
    %828 = vmatprep.subr.mxu0 0.0
    %829 = vmatpush1.xpose.msra.mxu0 %v820
    %830 = vmatprep.subr.mxu0 0.0
    %831 = vmatpush1.xpose.msra.mxu0 %v822
    %832 = vmatprep.subr.mxu0 0.0
    %833 = vmatpush1.xpose.msra.mxu0 %v824
    %834 = vmatprep.subr.mxu0 0.0
    %835 = vmatpush1.xpose.msra.mxu0 %v826
    %836 = vmatprep.subr.mxu0 0.0
    %837 = vmatpush1.xpose.msra.mxu0 0.0
    %838 = vmatprep.subr.mxu0 0.0
    %839 = vmatpush1.xpose.msra.mxu0 0.0
    %840 = vmatprep.subr.mxu0 0.0
    %841 = vmatpush1.xpose.msra.mxu0 0.0
    %842 = vmatprep.subr.mxu0 0.0
    %843 = vmatpush1.xpose.msra.mxu0 0.0
    %844 = vmatprep.subr.mxu0 0.0
    %845 = vmatpush1.xpose.msra.mxu0 0.0
    %846 = vmatprep.subr.mxu0 0.0
    %847 = vmatpush1.xpose.msra.mxu0 0.0
    %848 = vmatprep.subr.mxu0 0.0
    %849 = vmatpush1.xpose.msra.mxu0 0.0
    %850 = vmatprep.subr.mxu0 0.0
    %851 = vmatpush1.xpose.msra.mxu0 0.0
    %852 = vmatprep.subr.mxu0 0.0
    %853 = vmatpush1.xpose.msra.mxu0 0.0
    %854 = vmatprep.subr.mxu0 0.0
    %855 = vmatpush1.xpose.msra.mxu0 0.0
    %856 = vmatprep.subr.mxu0 0.0
    %857 = vmatpush1.xpose.msra.mxu0 0.0
    %858 = vmatprep.subr.mxu0 0.0
    %859 = vmatpush1.xpose.msra.mxu0 0.0
    %860 = vmatprep.subr.mxu0 0.0
    %861 = vmatpush1.xpose.msra.mxu0 0.0
    %862 = vmatprep.subr.mxu0 0.0
    %863 = vmatpush1.xpose.msra.mxu0 0.0
    %864 = vmatprep.subr.mxu0 0.0
    %865 = vmatpush1.xpose.msra.mxu0 0.0
    %866 = vmatprep.subr.mxu0 0.0
    %867 = vmatpush1.xpose.msra.mxu0 0.0
    %868 = vmatprep.subr.mxu0 0.0
    %869 = vmatpush1.xpose.msra.mxu0 0.0
    %870 = vmatprep.subr.mxu0 0.0
    %871 = vmatpush1.xpose.msra.mxu0 0.0
    %872 = vmatprep.subr.mxu0 0.0
    %873 = vmatpush1.xpose.msra.mxu0 0.0
    %874 = vmatprep.subr.mxu0 0.0
    %875 = vmatpush1.xpose.msra.mxu0 0.0
    %876 = vmatprep.subr.mxu0 0.0
    %877 = vmatpush1.xpose.msra.mxu0 0.0
    %878 = vmatprep.subr.mxu0 0.0
    %879 = vmatpush1.xpose.msra.mxu0 0.0
    %880 = vmatprep.subr.mxu0 0.0
    %881 = vmatpush1.xpose.msra.mxu0 0.0
    %882 = vmatprep.subr.mxu0 0.0
    %883 = vmatpush1.xpose.msra.mxu0 0.0
    %884 = vmatprep.subr.mxu0 0.0
    %885 = vmatpush1.xpose.msra.mxu0 0.0
    %886 = vmatprep.subr.mxu0 0.0
    %887 = vmatpush1.xpose.msra.mxu0 0.0
    %888 = vmatprep.subr.mxu0 0.0
    %889 = vmatpush1.xpose.msra.mxu0 0.0
    %890 = vmatprep.subr.mxu0 0.0
    %891 = vmatpush1.xpose.msra.mxu0 0.0
    %892 = vmatprep.mubr.f32.mxu0 0.0
    %893 = vmatmul.mubr.f32.gmra.mrb[0].mxu0 %v816
    %v894 = vpop.f32.mrb[0].mxu0
    %v895 = vadd.f32 0.0, %v894
    %v896 = vpop.f32.mrb[0].mxu0
    %897 = vmatprep.mubr.f32.mxu0 0.0
    %898 = vmatmul.mubr.f32.gmra.mrb[0].mxu0 %v818
    %v899 = vpop.f32.mrb[0].mxu0
    %v900 = vadd.f32 0.0, %v899
    %v901 = vpop.f32.mrb[0].mxu0
    %902 = vdwg.mxu0
    %v903 = vmul.f32 %v895, 0.35355338
    %v904 = vmul.f32 %v900, 0.35355338
    %v905 = vadd.f32 %v903, %v33
    %v906 = vadd.f32 %v904, %v34
    %v907 = vsel %vm41, %v905, -inf
    %908 = vmax.xlane.f32.xlu0 %v907
    %v909 = vpop.xlane.xlu0 %908
    %v910 = vsel %vm41, %v906, -inf
    %911 = vmax.xlane.f32.xlu0 %v910
    %v912 = vpop.xlane.xlu0 %911
    %v913 = vsub.f32 %v905, %v909
    %v914 = vsub.f32 %v906, %v912
    %v915 = vmul.f32 %v913, 1.442695
    %v916 = vpow.pop %v915
    %v917 = vmul.f32 %v914, 1.442695
    %v918 = vpow.pop %v917
    %v919 = vsel %vm41, %v916, 0.0
    %920 = vadd.xlane.f32.xlu0 %v919
    %v921 = vpop.xlane.xlu0 %920
    %v922 = vsel %vm41, %v918, 0.0
    %923 = vadd.xlane.f32.xlu0 %v922
    %v924 = vpop.xlane.xlu0 %923
    %v925 = vrcp.pop %v921
    %v926 = vrcp.pop %v924
    %v927 = vmul.f32 %v916, %v925
    %v928 = vmul.f32 %v918, %v926
    %929 = vrot.lane.b32.xlu0 %v181, 48
    %v930 = vpop.permute.xlu0 %929
    %931 = vrot.lane.b32.xlu0 %v182, 48
    %v932 = vpop.permute.xlu0 %931
    %933 = vrot.lane.b32.xlu0 %v183, 48
    %v934 = vpop.permute.xlu0 %933
    %935 = vrot.lane.b32.xlu0 %v184, 48
    %v936 = vpop.permute.xlu0 %935
    %v942 = vsel %vm41, %v927, 0
    %v945 = vsel %vm41, %v928, 0
    %947 = vmatprep.subr.mxu0 0.0
    %948 = vmatpush1.msra.mxu0 %v930
    %949 = vmatprep.subr.mxu0 0.0
    %950 = vmatpush1.msra.mxu0 %v932
    %951 = vmatprep.subr.mxu0 0.0
    %952 = vmatpush1.msra.mxu0 %v934
    %953 = vmatprep.subr.mxu0 0.0
    %954 = vmatpush1.msra.mxu0 %v936
    %955 = vmatprep.subr.mxu0 0.0
    %956 = vmatpush1.msra.mxu0 0.0
    %957 = vmatprep.subr.mxu0 0.0
    %958 = vmatpush1.msra.mxu0 0.0
    %959 = vmatprep.subr.mxu0 0.0
    %960 = vmatpush1.msra.mxu0 0.0
    %961 = vmatprep.subr.mxu0 0.0
    %962 = vmatpush1.msra.mxu0 0.0
    %963 = vmatprep.subr.mxu0 0.0
    %964 = vmatpush1.msra.mxu0 0.0
    %965 = vmatprep.subr.mxu0 0.0
    %966 = vmatpush1.msra.mxu0 0.0
    %967 = vmatprep.subr.mxu0 0.0
    %968 = vmatpush1.msra.mxu0 0.0
    %969 = vmatprep.subr.mxu0 0.0
    %970 = vmatpush1.msra.mxu0 0.0
    %971 = vmatprep.subr.mxu0 0.0
    %972 = vmatpush1.msra.mxu0 0.0
    %973 = vmatprep.subr.mxu0 0.0
    %974 = vmatpush1.msra.mxu0 0.0
    %975 = vmatprep.subr.mxu0 0.0
    %976 = vmatpush1.msra.mxu0 0.0
    %977 = vmatprep.subr.mxu0 0.0
    %978 = vmatpush1.msra.mxu0 0.0
    %979 = vmatprep.subr.mxu0 0.0
    %980 = vmatpush1.msra.mxu0 0.0
    %981 = vmatprep.subr.mxu0 0.0
    %982 = vmatpush1.msra.mxu0 0.0
    %983 = vmatprep.subr.mxu0 0.0
    %984 = vmatpush1.msra.mxu0 0.0
    %985 = vmatprep.subr.mxu0 0.0
    %986 = vmatpush1.msra.mxu0 0.0
    %987 = vmatprep.subr.mxu0 0.0
    %988 = vmatpush1.msra.mxu0 0.0
    %989 = vmatprep.subr.mxu0 0.0
    %990 = vmatpush1.msra.mxu0 0.0
    %991 = vmatprep.subr.mxu0 0.0
    %992 = vmatpush1.msra.mxu0 0.0
    %993 = vmatprep.subr.mxu0 0.0
    %994 = vmatpush1.msra.mxu0 0.0
    %995 = vmatprep.subr.mxu0 0.0
    %996 = vmatpush1.msra.mxu0 0.0
    %997 = vmatprep.subr.mxu0 0.0
    %998 = vmatpush1.msra.mxu0 0.0
    %999 = vmatprep.subr.mxu0 0.0
    %1000 = vmatpush1.msra.mxu0 0.0
    %1001 = vmatprep.subr.mxu0 0.0
    %1002 = vmatpush1.msra.mxu0 0.0
    %1003 = vmatprep.subr.mxu0 0.0
    %1004 = vmatpush1.msra.mxu0 0.0
    %1005 = vmatprep.subr.mxu0 0.0
    %1006 = vmatpush1.msra.mxu0 0.0
    %1007 = vmatprep.subr.mxu0 0.0
    %1008 = vmatpush1.msra.mxu0 0.0
    %1009 = vmatprep.subr.mxu0 0.0
    %1010 = vmatpush1.msra.mxu0 0.0
    %1011 = vmatprep.mubr.f32.mxu0 0.0
    %1012 = vmatmul.mubr.f32.gmra.mrb[0].mxu0 %v942
    %v1013 = vpop.f32.mrb[0].mxu0
    %v1014 = vadd.f32 0.0, %v1013
    %v1015 = vpop.f32.mrb[0].mxu0
    %1016 = vmatprep.mubr.f32.mxu0 0.0
    %1017 = vmatmul.mubr.f32.gmra.mrb[0].mxu0 %v945
    %v1018 = vpop.f32.mrb[0].mxu0
    %v1019 = vadd.f32 0.0, %v1018
    %v1020 = vpop.f32.mrb[0].mxu0
    %1021 = vdwg.mxu0
    %v1023 = vsel %vm207, %v1014, 0
    %v1026 = vsel %vm207, %v1019, 0
    %1028 = vmatprep.subr.mxu0 0.0
    %1029 = vmatpush1.msra.mxu0 %v187
    %1030 = vmatprep.subr.mxu0 0.0
    %1031 = vmatpush1.msra.mxu0 0.0
    %1032 = vmatprep.subr.mxu0 0.0
    %1033 = vmatpush1.msra.mxu0 0.0
    %1034 = vmatprep.subr.mxu0 0.0
    %1035 = vmatpush1.msra.mxu0 0.0
    %1036 = vmatprep.subr.mxu0 0.0
    %1037 = vmatpush1.msra.mxu0 0.0
    %1038 = vmatprep.subr.mxu0 0.0
    %1039 = vmatpush1.msra.mxu0 0.0
    %1040 = vmatprep.subr.mxu0 0.0
    %1041 = vmatpush1.msra.mxu0 0.0
    %1042 = vmatprep.subr.mxu0 0.0
    %1043 = vmatpush1.msra.mxu0 0.0
    %1044 = vmatprep.subr.mxu0 0.0
    %1045 = vmatpush1.msra.mxu0 0.0
    %1046 = vmatprep.subr.mxu0 0.0
    %1047 = vmatpush1.msra.mxu0 0.0
    %1048 = vmatprep.subr.mxu0 0.0
    %1049 = vmatpush1.msra.mxu0 0.0
    %1050 = vmatprep.subr.mxu0 0.0
    %1051 = vmatpush1.msra.mxu0 0.0
    %1052 = vmatprep.subr.mxu0 0.0
    %1053 = vmatpush1.msra.mxu0 0.0
    %1054 = vmatprep.subr.mxu0 0.0
    %1055 = vmatpush1.msra.mxu0 0.0
    %1056 = vmatprep.subr.mxu0 0.0
    %1057 = vmatpush1.msra.mxu0 0.0
    %1058 = vmatprep.subr.mxu0 0.0
    %1059 = vmatpush1.msra.mxu0 0.0
    %1060 = vmatprep.subr.mxu0 0.0
    %1061 = vmatpush1.msra.mxu0 0.0
    %1062 = vmatprep.subr.mxu0 0.0
    %1063 = vmatpush1.msra.mxu0 0.0
    %1064 = vmatprep.subr.mxu0 0.0
    %1065 = vmatpush1.msra.mxu0 0.0
    %1066 = vmatprep.subr.mxu0 0.0
    %1067 = vmatpush1.msra.mxu0 0.0
    %1068 = vmatprep.subr.mxu0 0.0
    %1069 = vmatpush1.msra.mxu0 0.0
    %1070 = vmatprep.subr.mxu0 0.0
    %1071 = vmatpush1.msra.mxu0 0.0
    %1072 = vmatprep.subr.mxu0 0.0
    %1073 = vmatpush1.msra.mxu0 0.0
    %1074 = vmatprep.subr.mxu0 0.0
    %1075 = vmatpush1.msra.mxu0 0.0
    %1076 = vmatprep.subr.mxu0 0.0
    %1077 = vmatpush1.msra.mxu0 0.0
    %1078 = vmatprep.subr.mxu0 0.0
    %1079 = vmatpush1.msra.mxu0 0.0
    %1080 = vmatprep.subr.mxu0 0.0
    %1081 = vmatpush1.msra.mxu0 0.0
    %1082 = vmatprep.subr.mxu0 0.0
    %1083 = vmatpush1.msra.mxu0 0.0
    %1084 = vmatprep.subr.mxu0 0.0
    %1085 = vmatpush1.msra.mxu0 0.0
    %1086 = vmatprep.subr.mxu0 0.0
    %1087 = vmatpush1.msra.mxu0 0.0
    %1088 = vmatprep.subr.mxu0 0.0
    %1089 = vmatpush1.msra.mxu0 0.0
    %1090 = vmatprep.subr.mxu0 0.0
    %1091 = vmatpush1.msra.mxu0 0.0
    %1092 = vmatprep.mubr.f32.mxu0 0.0
    %1093 = vmatmul.mubr.f32.gmra.mrb[0].mxu0 %v1023
    %v1094 = vpop.f32.mrb[0].mxu0
    %v1095 = vadd.f32 0.0, %v1094
    %v1096 = vpop.f32.mrb[0].mxu0
    %1097 = vmatprep.mubr.f32.mxu0 0.0
    %1098 = vmatmul.mubr.f32.gmra.mrb[0].mxu0 %v1026
    %v1099 = vpop.f32.mrb[0].mxu0
    %v1100 = vadd.f32 0.0, %v1099
    %v1101 = vpop.f32.mrb[0].mxu0
    %1102 = vdwg.mxu0
    %v1103 = vadd.f32 %v802, %v1095
    %v1104 = vadd.f32 %v803, %v1100
    %1105 = vrot.lane.b32.xlu0 %v159, 104
    %v1106 = vpop.permute.xlu0 %1105
    %1107 = vrot.lane.b32.xlu0 %v160, 104
    %v1108 = vpop.permute.xlu0 %1107
    %1109 = vrot.lane.b32.xlu0 %v169, 72
    %v1110 = vpop.permute.xlu0 %1109
    %1111 = vrot.lane.b32.xlu0 %v170, 72
    %v1112 = vpop.permute.xlu0 %1111
    %1113 = vrot.lane.b32.xlu0 %v171, 72
    %v1114 = vpop.permute.xlu0 %1113
    %1115 = vrot.lane.b32.xlu0 %v172, 72
    %v1116 = vpop.permute.xlu0 %1115
    %v1117 = vsel %vm207, %v1106, 0
    %v1119 = vsel %vm207, %v1108, 0
    %v1121 = vsel %vm207, %v1110, 0
    %v1123 = vsel %vm207, %v1112, 0
    %v1125 = vsel %vm207, %v1114, 0
    %v1127 = vsel %vm207, %v1116, 0
    %1129 = vmatprep.subr.mxu0 0.0
    %1130 = vmatpush1.xpose.msra.mxu0 %v1121
    %1131 = vmatprep.subr.mxu0 0.0
    %1132 = vmatpush1.xpose.msra.mxu0 %v1123
    %1133 = vmatprep.subr.mxu0 0.0
    %1134 = vmatpush1.xpose.msra.mxu0 %v1125
    %1135 = vmatprep.subr.mxu0 0.0
    %1136 = vmatpush1.xpose.msra.mxu0 %v1127
    %1137 = vmatprep.subr.mxu0 0.0
    %1138 = vmatpush1.xpose.msra.mxu0 0.0
    %1139 = vmatprep.subr.mxu0 0.0
    %1140 = vmatpush1.xpose.msra.mxu0 0.0
    %1141 = vmatprep.subr.mxu0 0.0
    %1142 = vmatpush1.xpose.msra.mxu0 0.0
    %1143 = vmatprep.subr.mxu0 0.0
    %1144 = vmatpush1.xpose.msra.mxu0 0.0
    %1145 = vmatprep.subr.mxu0 0.0
    %1146 = vmatpush1.xpose.msra.mxu0 0.0
    %1147 = vmatprep.subr.mxu0 0.0
    %1148 = vmatpush1.xpose.msra.mxu0 0.0
    %1149 = vmatprep.subr.mxu0 0.0
    %1150 = vmatpush1.xpose.msra.mxu0 0.0
    %1151 = vmatprep.subr.mxu0 0.0
    %1152 = vmatpush1.xpose.msra.mxu0 0.0
    %1153 = vmatprep.subr.mxu0 0.0
    %1154 = vmatpush1.xpose.msra.mxu0 0.0
    %1155 = vmatprep.subr.mxu0 0.0
    %1156 = vmatpush1.xpose.msra.mxu0 0.0
    %1157 = vmatprep.subr.mxu0 0.0
    %1158 = vmatpush1.xpose.msra.mxu0 0.0
    %1159 = vmatprep.subr.mxu0 0.0
    %1160 = vmatpush1.xpose.msra.mxu0 0.0
    %1161 = vmatprep.subr.mxu0 0.0
    %1162 = vmatpush1.xpose.msra.mxu0 0.0
    %1163 = vmatprep.subr.mxu0 0.0
    %1164 = vmatpush1.xpose.msra.mxu0 0.0
    %1165 = vmatprep.subr.mxu0 0.0
    %1166 = vmatpush1.xpose.msra.mxu0 0.0
    %1167 = vmatprep.subr.mxu0 0.0
    %1168 = vmatpush1.xpose.msra.mxu0 0.0
    %1169 = vmatprep.subr.mxu0 0.0
    %1170 = vmatpush1.xpose.msra.mxu0 0.0
    %1171 = vmatprep.subr.mxu0 0.0
    %1172 = vmatpush1.xpose.msra.mxu0 0.0
    %1173 = vmatprep.subr.mxu0 0.0
    %1174 = vmatpush1.xpose.msra.mxu0 0.0
    %1175 = vmatprep.subr.mxu0 0.0
    %1176 = vmatpush1.xpose.msra.mxu0 0.0
    %1177 = vmatprep.subr.mxu0 0.0
    %1178 = vmatpush1.xpose.msra.mxu0 0.0
    %1179 = vmatprep.subr.mxu0 0.0
    %1180 = vmatpush1.xpose.msra.mxu0 0.0
    %1181 = vmatprep.subr.mxu0 0.0
    %1182 = vmatpush1.xpose.msra.mxu0 0.0
    %1183 = vmatprep.subr.mxu0 0.0
    %1184 = vmatpush1.xpose.msra.mxu0 0.0
    %1185 = vmatprep.subr.mxu0 0.0
    %1186 = vmatpush1.xpose.msra.mxu0 0.0
    %1187 = vmatprep.subr.mxu0 0.0
    %1188 = vmatpush1.xpose.msra.mxu0 0.0
    %1189 = vmatprep.subr.mxu0 0.0
    %1190 = vmatpush1.xpose.msra.mxu0 0.0
    %1191 = vmatprep.subr.mxu0 0.0
    %1192 = vmatpush1.xpose.msra.mxu0 0.0
    %1193 = vmatprep.mubr.f32.mxu0 0.0
    %1194 = vmatmul.mubr.f32.gmra.mrb[0].mxu0 %v1117
    %v1195 = vpop.f32.mrb[0].mxu0
    %v1196 = vadd.f32 0.0, %v1195
    %v1197 = vpop.f32.mrb[0].mxu0
    %1198 = vmatprep.mubr.f32.mxu0 0.0
    %1199 = vmatmul.mubr.f32.gmra.mrb[0].mxu0 %v1119
    %v1200 = vpop.f32.mrb[0].mxu0
    %v1201 = vadd.f32 0.0, %v1200
    %v1202 = vpop.f32.mrb[0].mxu0
    %1203 = vdwg.mxu0
    %v1204 = vmul.f32 %v1196, 0.35355338
    %v1205 = vmul.f32 %v1201, 0.35355338
    %v1206 = vadd.f32 %v1204, %v33
    %v1207 = vadd.f32 %v1205, %v34
    %v1208 = vsel %vm41, %v1206, -inf
    %1209 = vmax.xlane.f32.xlu0 %v1208
    %v1210 = vpop.xlane.xlu0 %1209
    %v1211 = vsel %vm41, %v1207, -inf
    %1212 = vmax.xlane.f32.xlu0 %v1211
    %v1213 = vpop.xlane.xlu0 %1212
    %v1214 = vsub.f32 %v1206, %v1210
    %v1215 = vsub.f32 %v1207, %v1213
    %v1216 = vmul.f32 %v1214, 1.442695
    %v1217 = vpow.pop %v1216
    %v1218 = vmul.f32 %v1215, 1.442695
    %v1219 = vpow.pop %v1218
    %v1220 = vsel %vm41, %v1217, 0.0
    %1221 = vadd.xlane.f32.xlu0 %v1220
    %v1222 = vpop.xlane.xlu0 %1221
    %v1223 = vsel %vm41, %v1219, 0.0
    %1224 = vadd.xlane.f32.xlu0 %v1223
    %v1225 = vpop.xlane.xlu0 %1224
    %v1226 = vrcp.pop %v1222
    %v1227 = vrcp.pop %v1225
    %v1228 = vmul.f32 %v1217, %v1226
    %v1229 = vmul.f32 %v1219, %v1227
    %1230 = vrot.lane.b32.xlu0 %v181, 40
    %v1231 = vpop.permute.xlu0 %1230
    %1232 = vrot.lane.b32.xlu0 %v182, 40
    %v1233 = vpop.permute.xlu0 %1232
    %1234 = vrot.lane.b32.xlu0 %v183, 40
    %v1235 = vpop.permute.xlu0 %1234
    %1236 = vrot.lane.b32.xlu0 %v184, 40
    %v1237 = vpop.permute.xlu0 %1236
    %v1243 = vsel %vm41, %v1228, 0
    %v1246 = vsel %vm41, %v1229, 0
    %1248 = vmatprep.subr.mxu0 0.0
    %1249 = vmatpush1.msra.mxu0 %v1231
    %1250 = vmatprep.subr.mxu0 0.0
    %1251 = vmatpush1.msra.mxu0 %v1233
    %1252 = vmatprep.subr.mxu0 0.0
    %1253 = vmatpush1.msra.mxu0 %v1235
    %1254 = vmatprep.subr.mxu0 0.0
    %1255 = vmatpush1.msra.mxu0 %v1237
    %1256 = vmatprep.subr.mxu0 0.0
    %1257 = vmatpush1.msra.mxu0 0.0
    %1258 = vmatprep.subr.mxu0 0.0
    %1259 = vmatpush1.msra.mxu0 0.0
    %1260 = vmatprep.subr.mxu0 0.0
    %1261 = vmatpush1.msra.mxu0 0.0
    %1262 = vmatprep.subr.mxu0 0.0
    %1263 = vmatpush1.msra.mxu0 0.0
    %1264 = vmatprep.subr.mxu0 0.0
    %1265 = vmatpush1.msra.mxu0 0.0
    %1266 = vmatprep.subr.mxu0 0.0
    %1267 = vmatpush1.msra.mxu0 0.0
    %1268 = vmatprep.subr.mxu0 0.0
    %1269 = vmatpush1.msra.mxu0 0.0
    %1270 = vmatprep.subr.mxu0 0.0
    %1271 = vmatpush1.msra.mxu0 0.0
    %1272 = vmatprep.subr.mxu0 0.0
    %1273 = vmatpush1.msra.mxu0 0.0
    %1274 = vmatprep.subr.mxu0 0.0
    %1275 = vmatpush1.msra.mxu0 0.0
    %1276 = vmatprep.subr.mxu0 0.0
    %1277 = vmatpush1.msra.mxu0 0.0
    %1278 = vmatprep.subr.mxu0 0.0
    %1279 = vmatpush1.msra.mxu0 0.0
    %1280 = vmatprep.subr.mxu0 0.0
    %1281 = vmatpush1.msra.mxu0 0.0
    %1282 = vmatprep.subr.mxu0 0.0
    %1283 = vmatpush1.msra.mxu0 0.0
    %1284 = vmatprep.subr.mxu0 0.0
    %1285 = vmatpush1.msra.mxu0 0.0
    %1286 = vmatprep.subr.mxu0 0.0
    %1287 = vmatpush1.msra.mxu0 0.0
    %1288 = vmatprep.subr.mxu0 0.0
    %1289 = vmatpush1.msra.mxu0 0.0
    %1290 = vmatprep.subr.mxu0 0.0
    %1291 = vmatpush1.msra.mxu0 0.0
    %1292 = vmatprep.subr.mxu0 0.0
    %1293 = vmatpush1.msra.mxu0 0.0
    %1294 = vmatprep.subr.mxu0 0.0
    %1295 = vmatpush1.msra.mxu0 0.0
    %1296 = vmatprep.subr.mxu0 0.0
    %1297 = vmatpush1.msra.mxu0 0.0
    %1298 = vmatprep.subr.mxu0 0.0
    %1299 = vmatpush1.msra.mxu0 0.0
    %1300 = vmatprep.subr.mxu0 0.0
    %1301 = vmatpush1.msra.mxu0 0.0
    %1302 = vmatprep.subr.mxu0 0.0
    %1303 = vmatpush1.msra.mxu0 0.0
    %1304 = vmatprep.subr.mxu0 0.0
    %1305 = vmatpush1.msra.mxu0 0.0
    %1306 = vmatprep.subr.mxu0 0.0
    %1307 = vmatpush1.msra.mxu0 0.0
    %1308 = vmatprep.subr.mxu0 0.0
    %1309 = vmatpush1.msra.mxu0 0.0
    %1310 = vmatprep.subr.mxu0 0.0
    %1311 = vmatpush1.msra.mxu0 0.0
    %1312 = vmatprep.mubr.f32.mxu0 0.0
    %1313 = vmatmul.mubr.f32.gmra.mrb[0].mxu0 %v1243
    %v1314 = vpop.f32.mrb[0].mxu0
    %v1315 = vadd.f32 0.0, %v1314
    %v1316 = vpop.f32.mrb[0].mxu0
    %1317 = vmatprep.mubr.f32.mxu0 0.0
    %1318 = vmatmul.mubr.f32.gmra.mrb[0].mxu0 %v1246
    %v1319 = vpop.f32.mrb[0].mxu0
    %v1320 = vadd.f32 0.0, %v1319
    %v1321 = vpop.f32.mrb[0].mxu0
    %1322 = vdwg.mxu0
    %v1324 = vsel %vm207, %v1315, 0
    %v1327 = vsel %vm207, %v1320, 0
    %1329 = vmatprep.subr.mxu0 0.0
    %1330 = vmatpush1.msra.mxu0 %v188
    %1331 = vmatprep.subr.mxu0 0.0
    %1332 = vmatpush1.msra.mxu0 0.0
    %1333 = vmatprep.subr.mxu0 0.0
    %1334 = vmatpush1.msra.mxu0 0.0
    %1335 = vmatprep.subr.mxu0 0.0
    %1336 = vmatpush1.msra.mxu0 0.0
    %1337 = vmatprep.subr.mxu0 0.0
    %1338 = vmatpush1.msra.mxu0 0.0
    %1339 = vmatprep.subr.mxu0 0.0
    %1340 = vmatpush1.msra.mxu0 0.0
    %1341 = vmatprep.subr.mxu0 0.0
    %1342 = vmatpush1.msra.mxu0 0.0
    %1343 = vmatprep.subr.mxu0 0.0
    %1344 = vmatpush1.msra.mxu0 0.0
    %1345 = vmatprep.subr.mxu0 0.0
    %1346 = vmatpush1.msra.mxu0 0.0
    %1347 = vmatprep.subr.mxu0 0.0
    %1348 = vmatpush1.msra.mxu0 0.0
    %1349 = vmatprep.subr.mxu0 0.0
    %1350 = vmatpush1.msra.mxu0 0.0
    %1351 = vmatprep.subr.mxu0 0.0
    %1352 = vmatpush1.msra.mxu0 0.0
    %1353 = vmatprep.subr.mxu0 0.0
    %1354 = vmatpush1.msra.mxu0 0.0
    %1355 = vmatprep.subr.mxu0 0.0
    %1356 = vmatpush1.msra.mxu0 0.0
    %1357 = vmatprep.subr.mxu0 0.0
    %1358 = vmatpush1.msra.mxu0 0.0
    %1359 = vmatprep.subr.mxu0 0.0
    %1360 = vmatpush1.msra.mxu0 0.0
    %1361 = vmatprep.subr.mxu0 0.0
    %1362 = vmatpush1.msra.mxu0 0.0
    %1363 = vmatprep.subr.mxu0 0.0
    %1364 = vmatpush1.msra.mxu0 0.0
    %1365 = vmatprep.subr.mxu0 0.0
    %1366 = vmatpush1.msra.mxu0 0.0
    %1367 = vmatprep.subr.mxu0 0.0
    %1368 = vmatpush1.msra.mxu0 0.0
    %1369 = vmatprep.subr.mxu0 0.0
    %1370 = vmatpush1.msra.mxu0 0.0
    %1371 = vmatprep.subr.mxu0 0.0
    %1372 = vmatpush1.msra.mxu0 0.0
    %1373 = vmatprep.subr.mxu0 0.0
    %1374 = vmatpush1.msra.mxu0 0.0
    %1375 = vmatprep.subr.mxu0 0.0
    %1376 = vmatpush1.msra.mxu0 0.0
    %1377 = vmatprep.subr.mxu0 0.0
    %1378 = vmatpush1.msra.mxu0 0.0
    %1379 = vmatprep.subr.mxu0 0.0
    %1380 = vmatpush1.msra.mxu0 0.0
    %1381 = vmatprep.subr.mxu0 0.0
    %1382 = vmatpush1.msra.mxu0 0.0
    %1383 = vmatprep.subr.mxu0 0.0
    %1384 = vmatpush1.msra.mxu0 0.0
    %1385 = vmatprep.subr.mxu0 0.0
    %1386 = vmatpush1.msra.mxu0 0.0
    %1387 = vmatprep.subr.mxu0 0.0
    %1388 = vmatpush1.msra.mxu0 0.0
    %1389 = vmatprep.subr.mxu0 0.0
    %1390 = vmatpush1.msra.mxu0 0.0
    %1391 = vmatprep.subr.mxu0 0.0
    %1392 = vmatpush1.msra.mxu0 0.0
    %1393 = vmatprep.mubr.f32.mxu0 0.0
    %1394 = vmatmul.mubr.f32.gmra.mrb[0].mxu0 %v1324
    %v1395 = vpop.f32.mrb[0].mxu0
    %v1396 = vadd.f32 0.0, %v1395
    %v1397 = vpop.f32.mrb[0].mxu0
    %1398 = vmatprep.mubr.f32.mxu0 0.0
    %1399 = vmatmul.mubr.f32.gmra.mrb[0].mxu0 %v1327
    %v1400 = vpop.f32.mrb[0].mxu0
    %v1401 = vadd.f32 0.0, %v1400
    %v1402 = vpop.f32.mrb[0].mxu0
    %1403 = vdwg.mxu0
    %v1404 = vadd.f32 %v1103, %v1396
    %v1405 = vadd.f32 %v1104, %v1401
    %v1406 = vsel %vm41, %v1404, 0.0
    %1407 = vadd.xlane.f32.xlu0 %v1406
    %v1408 = vpop.xlane.xlu0 %1407
    %v1409 = vsel %vm41, %v1405, 0.0
    %1410 = vadd.xlane.f32.xlu0 %v1409
    %v1411 = vpop.xlane.xlu0 %1410
    %v1412 = vrcp.pop 32.0
    %v1413 = vmul.f32 %v1408, %v1412
    %v1414 = vmul.f32 %v1411, %v1412
    %v1415 = vsub.f32 %v1404, %v1413
    %v1416 = vsub.f32 %v1405, %v1414
    %v1417 = vmul.f32 %v1415, %v1415
    %v1418 = vmul.f32 %v1416, %v1416
    %v1419 = vsel %vm41, %v1417, 0.0
    %1420 = vadd.xlane.f32.xlu0 %v1419
    %v1421 = vpop.xlane.xlu0 %1420
    %v1422 = vsel %vm41, %v1418, 0.0
    %1423 = vadd.xlane.f32.xlu0 %v1422
    %v1424 = vpop.xlane.xlu0 %1423
    %v1425 = vmul.f32 %v1421, %v1412
    %v1426 = vmul.f32 %v1424, %v1412
    %v1427 = vadd.f32 %v1425, 1e-05
    %v1428 = vadd.f32 %v1426, 1e-05
    %v1429 = vrsqrt.pop %v1427
    %v1430 = vrsqrt.pop %v1428
    %v1431 = vmul.f32 %v1415, %v1429
    %v1432 = vmul.f32 %v1416, %v1430
    %v1433 = vlaneseq
    %v1434 = vshrl.u32 %v1433, 7
    %v1435 = vsub.s32 4, %v1434
    %v1436 = vrot.slane %v35, %v1435
    %v1437 = vmul.f32 %v1431, %v1436
    %v1438 = vmul.f32 %v1432, %v1436
    %v1439 = vlaneseq
    %v1440 = vshrl.u32 %v1439, 7
    %v1441 = vsub.s32 5, %v1440
    %v1442 = vrot.slane %v35, %v1441
    %v1443 = vadd.f32 %v1437, %v1442
    %v1444 = vadd.f32 %v1438, %v1442
    %v1445 = vld [vmem:[%s4] sm:$0xff]
    %v1446 = vld [vmem:[%s4 + $0x8] sm:$0xff]
    %v1447 = vld [vmem:[%s4 + $0x10] sm:$0xff]
    %v1448 = vld [vmem:[%s4 + $0x18] sm:$0xff]
    %v1449 = vlaneseq
    %v1450 = vshrl.u32 %v1449, 7
    %v1451 = vsub.s32 6, %v1450
    %v1452 = vrot.slane %v35, %v1451
    %v1454 = vsel %vm41, %v1443, 0
    %v1457 = vsel %vm41, %v1444, 0
    %1459 = vmatprep.subr.mxu0 0.0
    %1460 = vmatpush1.msra.mxu0 %v1445
    %1461 = vmatprep.subr.mxu0 0.0
    %1462 = vmatpush1.msra.mxu0 %v1446
    %1463 = vmatprep.subr.mxu0 0.0
    %1464 = vmatpush1.msra.mxu0 %v1447
    %1465 = vmatprep.subr.mxu0 0.0
    %1466 = vmatpush1.msra.mxu0 %v1448
    %1467 = vmatprep.subr.mxu0 0.0
    %1468 = vmatpush1.msra.mxu0 0.0
    %1469 = vmatprep.subr.mxu0 0.0
    %1470 = vmatpush1.msra.mxu0 0.0
    %1471 = vmatprep.subr.mxu0 0.0
    %1472 = vmatpush1.msra.mxu0 0.0
    %1473 = vmatprep.subr.mxu0 0.0
    %1474 = vmatpush1.msra.mxu0 0.0
    %1475 = vmatprep.subr.mxu0 0.0
    %1476 = vmatpush1.msra.mxu0 0.0
    %1477 = vmatprep.subr.mxu0 0.0
    %1478 = vmatpush1.msra.mxu0 0.0
    %1479 = vmatprep.subr.mxu0 0.0
    %1480 = vmatpush1.msra.mxu0 0.0
    %1481 = vmatprep.subr.mxu0 0.0
    %1482 = vmatpush1.msra.mxu0 0.0
    %1483 = vmatprep.subr.mxu0 0.0
    %1484 = vmatpush1.msra.mxu0 0.0
    %1485 = vmatprep.subr.mxu0 0.0
    %1486 = vmatpush1.msra.mxu0 0.0
    %1487 = vmatprep.subr.mxu0 0.0
    %1488 = vmatpush1.msra.mxu0 0.0
    %1489 = vmatprep.subr.mxu0 0.0
    %1490 = vmatpush1.msra.mxu0 0.0
    %1491 = vmatprep.subr.mxu0 0.0
    %1492 = vmatpush1.msra.mxu0 0.0
    %1493 = vmatprep.subr.mxu0 0.0
    %1494 = vmatpush1.msra.mxu0 0.0
    %1495 = vmatprep.subr.mxu0 0.0
    %1496 = vmatpush1.msra.mxu0 0.0
    %1497 = vmatprep.subr.mxu0 0.0
    %1498 = vmatpush1.msra.mxu0 0.0
    %1499 = vmatprep.subr.mxu0 0.0
    %1500 = vmatpush1.msra.mxu0 0.0
    %1501 = vmatprep.subr.mxu0 0.0
    %1502 = vmatpush1.msra.mxu0 0.0
    %1503 = vmatprep.subr.mxu0 0.0
    %1504 = vmatpush1.msra.mxu0 0.0
    %1505 = vmatprep.subr.mxu0 0.0
    %1506 = vmatpush1.msra.mxu0 0.0
    %1507 = vmatprep.subr.mxu0 0.0
    %1508 = vmatpush1.msra.mxu0 0.0
    %1509 = vmatprep.subr.mxu0 0.0
    %1510 = vmatpush1.msra.mxu0 0.0
    %1511 = vmatprep.subr.mxu0 0.0
    %1512 = vmatpush1.msra.mxu0 0.0
    %1513 = vmatprep.subr.mxu0 0.0
    %1514 = vmatpush1.msra.mxu0 0.0
    %1515 = vmatprep.subr.mxu0 0.0
    %1516 = vmatpush1.msra.mxu0 0.0
    %1517 = vmatprep.subr.mxu0 0.0
    %1518 = vmatpush1.msra.mxu0 0.0
    %1519 = vmatprep.subr.mxu0 0.0
    %1520 = vmatpush1.msra.mxu0 0.0
    %1521 = vmatprep.subr.mxu0 0.0
    %1522 = vmatpush1.msra.mxu0 0.0
    %1523 = vmatprep.mubr.f32.mxu0 0.0
    %1524 = vmatmul.mubr.f32.gmra.mrb[0].mxu0 %v1454
    %v1525 = vpop.f32.mrb[0].mxu0
    %v1526 = vadd.f32 %v1452, %v1525
    %v1527 = vpop.f32.mrb[0].mxu0
    %1528 = vmatprep.mubr.f32.mxu0 0.0
    %1529 = vmatmul.mubr.f32.gmra.mrb[0].mxu0 %v1457
    %v1530 = vpop.f32.mrb[0].mxu0
    %v1531 = vadd.f32 %v1452, %v1530
    %v1532 = vpop.f32.mrb[0].mxu0
    %1533 = vdwg.mxu0
    %v1534 = vmax.f32 %v1526, 0.0
    %v1535 = vmax.f32 %v1531, 0.0
    %v1536 = vld [vmem:[%s5] sm:$0xff]
    %v1537 = vld [vmem:[%s5 + $0x8] sm:$0xff]
    %v1538 = vlaneseq
    %v1539 = vshrl.u32 %v1538, 7
    %v1540 = vsub.s32 7, %v1539
    %v1541 = vrot.slane %v35, %v1540
    %vm1542 = vcmask 130048
    %v1544 = vsel %vm1542, %v1534, 0
    %v1547 = vsel %vm1542, %v1535, 0
    %1549 = vmatprep.subr.mxu0 0.0
    %1550 = vmatpush1.msra.mxu0 %v1536
    %1551 = vmatprep.subr.mxu0 0.0
    %1552 = vmatpush1.msra.mxu0 %v1537
    %1553 = vmatprep.subr.mxu0 0.0
    %1554 = vmatpush1.msra.mxu0 0.0
    %1555 = vmatprep.subr.mxu0 0.0
    %1556 = vmatpush1.msra.mxu0 0.0
    %1557 = vmatprep.subr.mxu0 0.0
    %1558 = vmatpush1.msra.mxu0 0.0
    %1559 = vmatprep.subr.mxu0 0.0
    %1560 = vmatpush1.msra.mxu0 0.0
    %1561 = vmatprep.subr.mxu0 0.0
    %1562 = vmatpush1.msra.mxu0 0.0
    %1563 = vmatprep.subr.mxu0 0.0
    %1564 = vmatpush1.msra.mxu0 0.0
    %1565 = vmatprep.subr.mxu0 0.0
    %1566 = vmatpush1.msra.mxu0 0.0
    %1567 = vmatprep.subr.mxu0 0.0
    %1568 = vmatpush1.msra.mxu0 0.0
    %1569 = vmatprep.subr.mxu0 0.0
    %1570 = vmatpush1.msra.mxu0 0.0
    %1571 = vmatprep.subr.mxu0 0.0
    %1572 = vmatpush1.msra.mxu0 0.0
    %1573 = vmatprep.subr.mxu0 0.0
    %1574 = vmatpush1.msra.mxu0 0.0
    %1575 = vmatprep.subr.mxu0 0.0
    %1576 = vmatpush1.msra.mxu0 0.0
    %1577 = vmatprep.subr.mxu0 0.0
    %1578 = vmatpush1.msra.mxu0 0.0
    %1579 = vmatprep.subr.mxu0 0.0
    %1580 = vmatpush1.msra.mxu0 0.0
    %1581 = vmatprep.subr.mxu0 0.0
    %1582 = vmatpush1.msra.mxu0 0.0
    %1583 = vmatprep.subr.mxu0 0.0
    %1584 = vmatpush1.msra.mxu0 0.0
    %1585 = vmatprep.subr.mxu0 0.0
    %1586 = vmatpush1.msra.mxu0 0.0
    %1587 = vmatprep.subr.mxu0 0.0
    %1588 = vmatpush1.msra.mxu0 0.0
    %1589 = vmatprep.subr.mxu0 0.0
    %1590 = vmatpush1.msra.mxu0 0.0
    %1591 = vmatprep.subr.mxu0 0.0
    %1592 = vmatpush1.msra.mxu0 0.0
    %1593 = vmatprep.subr.mxu0 0.0
    %1594 = vmatpush1.msra.mxu0 0.0
    %1595 = vmatprep.subr.mxu0 0.0
    %1596 = vmatpush1.msra.mxu0 0.0
    %1597 = vmatprep.subr.mxu0 0.0
    %1598 = vmatpush1.msra.mxu0 0.0
    %1599 = vmatprep.subr.mxu0 0.0
    %1600 = vmatpush1.msra.mxu0 0.0
    %1601 = vmatprep.subr.mxu0 0.0
    %1602 = vmatpush1.msra.mxu0 0.0
    %1603 = vmatprep.subr.mxu0 0.0
    %1604 = vmatpush1.msra.mxu0 0.0
    %1605 = vmatprep.subr.mxu0 0.0
    %1606 = vmatpush1.msra.mxu0 0.0
    %1607 = vmatprep.subr.mxu0 0.0
    %1608 = vmatpush1.msra.mxu0 0.0
    %1609 = vmatprep.subr.mxu0 0.0
    %1610 = vmatpush1.msra.mxu0 0.0
    %1611 = vmatprep.subr.mxu0 0.0
    %1612 = vmatpush1.msra.mxu0 0.0
    %1613 = vmatprep.mubr.f32.mxu0 0.0
    %1614 = vmatmul.mubr.f32.gmra.mrb[0].mxu0 %v1544
    %v1615 = vpop.f32.mrb[0].mxu0
    %v1616 = vadd.f32 %v1541, %v1615
    %v1617 = vpop.f32.mrb[0].mxu0
    %1618 = vmatprep.mubr.f32.mxu0 0.0
    %1619 = vmatmul.mubr.f32.gmra.mrb[0].mxu0 %v1547
    %v1620 = vpop.f32.mrb[0].mxu0
    %v1621 = vadd.f32 %v1541, %v1620
    %v1622 = vpop.f32.mrb[0].mxu0
    %1623 = vdwg.mxu0
    %v1624 = vadd.f32 %v1443, %v1616
    %v1625 = vadd.f32 %v1444, %v1621
    %v1626 = vsel %vm41, %v1624, 0.0
    %1627 = vadd.xlane.f32.xlu0 %v1626
    %v1628 = vpop.xlane.xlu0 %1627
    %v1629 = vsel %vm41, %v1625, 0.0
    %1630 = vadd.xlane.f32.xlu0 %v1629
    %v1631 = vpop.xlane.xlu0 %1630
    %v1632 = vmul.f32 %v1628, %v1412
    %v1633 = vmul.f32 %v1631, %v1412
    %v1634 = vsub.f32 %v1624, %v1632
    %v1635 = vsub.f32 %v1625, %v1633
    %v1636 = vmul.f32 %v1634, %v1634
    %v1637 = vmul.f32 %v1635, %v1635
    %v1638 = vsel %vm41, %v1636, 0.0
    %1639 = vadd.xlane.f32.xlu0 %v1638
    %v1640 = vpop.xlane.xlu0 %1639
    %v1641 = vsel %vm41, %v1637, 0.0
    %1642 = vadd.xlane.f32.xlu0 %v1641
    %v1643 = vpop.xlane.xlu0 %1642
    %v1644 = vmul.f32 %v1640, %v1412
    %v1645 = vmul.f32 %v1643, %v1412
    %v1646 = vadd.f32 %v1644, 1e-05
    %v1647 = vadd.f32 %v1645, 1e-05
    %v1648 = vrsqrt.pop %v1646
    %v1649 = vrsqrt.pop %v1647
    %v1650 = vmul.f32 %v1634, %v1648
    %v1651 = vmul.f32 %v1635, %v1649
    %v1652 = vlaneseq
    %v1653 = vshrl.u32 %v1652, 7
    %v1654 = vsub.s32 0, %v1653
    %v1655 = vrot.slane %v36, %v1654
    %v1656 = vmul.f32 %v1650, %v1655
    %v1657 = vmul.f32 %v1651, %v1655
    %v1658 = vlaneseq
    %v1659 = vshrl.u32 %v1658, 7
    %v1660 = vsub.s32 1, %v1659
    %v1661 = vrot.slane %v36, %v1660
    %v1662 = vadd.f32 %v1656, %v1661
    %v1663 = vadd.f32 %v1657, %v1661
    %1664 = vst.msk [vmem:[#allocation2] sm:$0xff] %vm41, %v1662
    %1665 = vst.msk [vmem:[#allocation2 + $0x8] sm:$0xff] %vm41, %v1663
    // Predicated region
    $region30: #{tpu_custom_call.1} parent=1 // pred_check
      _
    $region31: #{tpu_custom_call.1} parent=1 // pred_check_branch
      %1667 = sbr.rel (0) target = $region33
    $region32: #{tpu_custom_call.1} parent=1 // pred_region
      %s1669 = ssub.s32 256, 256
      %1670 = vsyncadd [#allocation3], %s1669
      %s1671 = sshll.u32 [#allocation2], 4
      %s1672 = int_to_ptr.vmem [resolvable:$true] %s1671
      %1677 = dma.vmem_to_hbm [thread:$0]  %s1672, 256, %s7, [#allocation3], 128, 128, 8
    $region33: #{tpu_custom_call.1} parent=1 // pred_fallthru
      _
    // Predicated region
    $region34: #{tpu_custom_call.1} parent=1 // pred_check
      _
    $region35: #{tpu_custom_call.1} parent=1 // pred_check_branch
      %1679 = sbr.rel (0) target = $region37
    $region36: #{tpu_custom_call.1} parent=1 // pred_region
      %1680 = dma.done [#allocation3], 256
    $region37: #{tpu_custom_call.1} parent=1 // pred_fallthru
      _
    %1681 = vsyncpa [#allocation3], 1

</llo_original>
